<compile_context>
chip_gen: v5e
topology: v5e:2x2
jax: 0.10.0
libtpu: 0.0.40
codegen_flags: <defaults>
</compile_context>

<pallas_src>
import jax
import jax.numpy as jnp
from jax.experimental import pallas as pl
from jax.experimental.pallas import tpu as pltpu


# --------------------------------------------------------------------------
# Kernel
# --------------------------------------------------------------------------
def cnn_kernel(x_ref, w1b_ref, b1_ref, w2b_ref, b2_ref,
               wf1_ref, bf1_ref, wf2_ref, bf2_ref, mask_ref, out_ref):
    f32, bf16 = jnp.float32, jnp.bfloat16
    TB = x_ref.shape[0]

    x = x_ref[...].astype(f32)                         # (TB, 28, 28)

    # ---- conv1: 1 -> 10, 5x5 valid (banded MXU matmuls, K=28, N=256) ------
    # output lane = (ow % 2) * 128 + (ow // 2) * 10 + c   (120 used / 128)
    def tap1(kh):
        xs = x[:, kh:kh + 24, :].reshape(TB * 24, 28).astype(bf16)
        return jnp.dot(xs, w1b_ref[kh], preferred_element_type=f32)

    r1 = tap1(0)                                        # init from first tap
    for kh in range(1, 5):
        r1 = r1 + tap1(kh)
    r1 = jnp.maximum(r1 + b1_ref[...], 0.0)             # (TB*24, 256) f32

    # ---- maxpool 2x2 stride 2: 24x24 -> 12x12 ------------------------------
    # width pool: max of the two 128-aligned parity slices (no lane shuffle)
    r1 = jnp.maximum(r1[:, :128], r1[:, 128:])          # (TB*24, 128)
    # height pool: sublane-only pairing
    r1 = r1.reshape(TB, 12, 2, 128)
    p1 = jnp.maximum(r1[:, :, 0, :], r1[:, :, 1, :])    # (TB, 12, 128) f32

    # ---- conv2: 10 -> 20, 5x5 valid (banded MXU matmuls, K=128, N=256) ----
    # input  lane = pooled_w * 10 + c                   (120 used / 128)
    # output lane = (ow % 2) * 128 + (ow // 2) * 20 + c (80  used / 128)
    def tap2(kh):
        ps = p1[:, kh:kh + 8, :].reshape(TB * 8, 128).astype(bf16)
        return jnp.dot(ps, w2b_ref[kh], preferred_element_type=f32)

    r2 = tap2(0)
    for kh in range(1, 5):
        r2 = r2 + tap2(kh)
    r2 = jnp.maximum(r2 + b2_ref[...], 0.0)             # (TB*8, 256) f32

    # ---- maxpool 2x2 stride 2: 8x8 -> 4x4 ----------------------------------
    r2 = jnp.maximum(r2[:, :128], r2[:, 128:])          # (TB*8, 128)
    r2 = r2.reshape(TB, 4, 2, 128)
    p2 = jnp.maximum(r2[:, :, 0, :], r2[:, :, 1, :])    # (TB, 4, 128) f32

    # ---- fc1: (TB,512) @ (512,50); padding-lane rows of wf1 are zero -------
    h = jnp.dot(p2.reshape(TB, 512).astype(bf16), wf1_ref[...],
                preferred_element_type=f32)
    h = jnp.maximum(h + bf1_ref[...], 0.0)              # (TB, 50) f32

    # ---- dropout p=0.5 (training mode, inverted) ----------------------------
    # TODO(synk): dropout mask is drawn wrapper-side with jax.random; it
    # cannot match torch's RNG stream.
    h = h * mask_ref[...]

    # ---- fc2: 50 -> 10 ------------------------------------------------------
    out_ref[...] = (jnp.dot(h.astype(bf16), wf2_ref[...],
                            preferred_element_type=f32) + bf2_ref[...])


# --------------------------------------------------------------------------
# Weight preprocessing (pure layout glue, constant per model)
# --------------------------------------------------------------------------
def _conv1_banded_weights(w_conv1):
    """(10,1,5,5) -> (5,28,256); column = (ow%2)*128 + (ow//2)*10 + c."""
    w1_t = jnp.transpose(w_conv1[:, 0], (1, 2, 0)).astype(jnp.float32)  # (kh,kw,c)
    iw = jnp.arange(28)[:, None, None]          # input width
    par = jnp.arange(2)[None, :, None]          # output width parity
    wp = jnp.arange(12)[None, None, :]          # pooled output width
    ow = 2 * wp + par                           # (1,2,12) output width
    acc = jnp.zeros((5, 28, 2, 12, 10), jnp.float32)   # (kh, iw, par, wp, c)
    for kw in range(5):
        sel = (iw == ow + kw).astype(jnp.float32)       # (28,2,12)
        acc = acc + sel[None, :, :, :, None] * w1_t[:, kw][:, None, None, None, :]
    out = jnp.zeros((5, 28, 2, 128), jnp.float32)
    out = out.at[..., :120].set(acc.reshape(5, 28, 2, 120))
    return out.reshape(5, 28, 256)


def _conv2_banded_weights(w_conv2):
    """(20,10,5,5) -> (5,128,256); row = in_wp*10+in_c (120 used),
    column = (ow%2)*128 + (ow//2)*20 + c (80 used per 128-block)."""
    w2_t = jnp.transpose(w_conv2, (2, 3, 1, 0)).astype(jnp.float32)  # (kh,kw,ci,co)
    iwp = jnp.arange(12)[:, None, None]         # input (pooled) width
    par = jnp.arange(2)[None, :, None]
    wq = jnp.arange(4)[None, None, :]
    ow = 2 * wq + par                           # (1,2,4)
    acc = jnp.zeros((5, 12, 10, 2, 4, 20), jnp.float32)  # (kh, iwp, ci, par, wq, co)
    for kw in range(5):
        sel = (iwp == ow + kw).astype(jnp.float32)        # (12,2,4)
        acc = acc + (sel[None, :, None, :, :, None]
                     * w2_t[:, kw][:, None, :, None, None, :])
    acc = acc.reshape(5, 120, 2, 80)
    out = jnp.zeros((5, 128, 2, 128), jnp.float32)
    out = out.at[:, :120, :, :80].set(acc)
    return out.reshape(5, 128, 256)


def _fc1_weights(w_fc1):
    """(50,320) torch (c,h,w)-flatten -> (512,50); row = h*128 + w*20 + c."""
    wt = jnp.transpose(w_fc1.reshape(50, 20, 4, 4), (2, 3, 1, 0))  # (h, w, c, out)
    wt = wt.reshape(4, 80, 50).astype(jnp.float32)
    out = jnp.zeros((4, 128, 50), jnp.float32).at[:, :80, :].set(wt)
    return out.reshape(512, 50)


def _batch_tile_and_vmem():
    """Per-generation batch tile and VMEM limit (v7x has 64 MiB per core)."""
    try:
        kind = jax.devices()[0].device_kind.lower()
    except Exception:
        kind = ""
    if "v7" in kind:
        return 256, 48 * 1024 * 1024
    if "v5" in kind or "v6" in kind:
        return 512, 96 * 1024 * 1024
    return 256, 48 * 1024 * 1024            # unknown: conservative, fits all gens


# --------------------------------------------------------------------------
# Wrapper
# --------------------------------------------------------------------------
def cnn_forward(x_nchw, params, key):
    (w_conv1, b_conv1, w_conv2, b_conv2, w_fc1, b_fc1, w_fc2, b_fc2) = params
    B = x_nchw.shape[0]

    # NCHW (B,1,28,28) -> (B,28,28) bf16 (halves the per-sample HBM traffic).
    x = x_nchw.reshape(B, 28, 28).astype(jnp.bfloat16)

    # Dropout mask {0.0, 2.0}: inverted dropout, p=0.5, training=True.
    mask = jax.random.bernoulli(key, 0.5, (B, 50)).astype(jnp.float32) * 2.0

    # Weights: bf16 MXU operands, f32 biases.
    w1b = _conv1_banded_weights(w_conv1).astype(jnp.bfloat16)   # (5, 28, 256)
    w2b = _conv2_banded_weights(w_conv2).astype(jnp.bfloat16)   # (5, 128, 256)
    wf1 = _fc1_weights(w_fc1).astype(jnp.bfloat16)              # (512, 50)
    wf2 = jnp.transpose(w_fc2).astype(jnp.bfloat16)             # (50, 10)
    b1k = jnp.zeros((2, 128), jnp.float32).at[:, :120].set(
        jnp.tile(b_conv1.astype(jnp.float32), 12)).reshape(1, 256)
    b2k = jnp.zeros((2, 128), jnp.float32).at[:, :80].set(
        jnp.tile(b_conv2.astype(jnp.float32), 4)).reshape(1, 256)
    bf1 = b_fc1.astype(jnp.float32).reshape(1, 50)
    bf2 = b_fc2.astype(jnp.float32).reshape(1, 10)

    tb_cap, vmem_bytes = _batch_tile_and_vmem()
    TB = min(B, tb_cap)
    Bp = pl.cdiv(B, TB) * TB
    if Bp != B:
        x = jnp.pad(x, ((0, Bp - B), (0, 0), (0, 0)))
        mask = jnp.pad(mask, ((0, Bp - B), (0, 0)))

    out = pl.pallas_call(
        cnn_kernel,
        out_shape=jax.ShapeDtypeStruct((Bp, 10), jnp.float32),
        grid_spec=pltpu.PrefetchScalarGridSpec(
            num_scalar_prefetch=0,
            grid=(Bp // TB,),
            in_specs=[
                pl.BlockSpec((TB, 28, 28), lambda i: (i, 0, 0)),    # x (bf16)
                pl.BlockSpec((5, 28, 256), lambda i: (0, 0, 0)),    # conv1 bands
                pl.BlockSpec((1, 256), lambda i: (0, 0)),           # conv1 bias
                pl.BlockSpec((5, 128, 256), lambda i: (0, 0, 0)),   # conv2 bands
                pl.BlockSpec((1, 256), lambda i: (0, 0)),           # conv2 bias
                pl.BlockSpec((512, 50), lambda i: (0, 0)),          # fc1 w
                pl.BlockSpec((1, 50), lambda i: (0, 0)),            # fc1 b
                pl.BlockSpec((50, 10), lambda i: (0, 0)),           # fc2 w
                pl.BlockSpec((1, 10), lambda i: (0, 0)),            # fc2 b
                pl.BlockSpec((TB, 50), lambda i: (i, 0)),           # dropout mask
            ],
            out_specs=pl.BlockSpec((TB, 10), lambda i: (i, 0)),
        ),
        compiler_params=pltpu.CompilerParams(
            dimension_semantics=("parallel",),
            vmem_limit_bytes=vmem_bytes,
        ),
    )(x, w1b, b1k, w2b, b2k, wf1, bf1, wf2, bf2, mask)

    return out[:B]


# --------------------------------------------------------------------------
# Params (matches torch default init shapes of the reference CNN)
# --------------------------------------------------------------------------
def init_params(key):
    ks = jax.random.split(key, 8)

    def u(k, shape, fan_in):
        bound = 1.0 / float(fan_in) ** 0.5
        return jax.random.uniform(k, shape, jnp.float32, -bound, bound)

    w_conv1 = u(ks[0], (10, 1, 5, 5), 25)       # nn.Conv2d(1, 10, 5)
    b_conv1 = u(ks[1], (10,), 25)
    w_conv2 = u(ks[2], (20, 10, 5, 5), 250)     # nn.Conv2d(10, 20, 5)
    b_conv2 = u(ks[3], (20,), 250)
    w_fc1 = u(ks[4], (50, 320), 320)            # nn.Linear(320, 50)
    b_fc1 = u(ks[5], (50,), 320)
    w_fc2 = u(ks[6], (10, 50), 50)              # nn.Linear(50, 10)
    b_fc2 = u(ks[7], (10,), 50)
    return (w_conv1, b_conv1, w_conv2, b_conv2, w_fc1, b_fc1, w_fc2, b_fc2)


if __name__ == "__main__":
    key = jax.random.PRNGKey(0)
    pkey, xkey, dkey = jax.random.split(key, 3)
    params = init_params(pkey)

    # MNIST-shaped input (fc1 in_features=320 fixes spatial size to 28x28).
    x = jax.random.normal(xkey, (2, 1, 28, 28), jnp.float32)   # NCHW like PyTorch

    fwd = jax.jit(cnn_forward)
    out = jax.block_until_ready(fwd(x, params, dkey))

    assert out.shape == (2, 10)
    assert bool(jnp.all(jnp.isfinite(out)))
    print("KERNEL_OK")
</pallas_src>

<mosaic_0001>
module attributes {stable_mosaic.version = 11 : i64} {
  func.func @cnn_kernel(%arg0: i32, %arg1: memref<2x28x28xbf16, #tpu.memory_space<vmem>>, %arg2: memref<5x28x256xbf16, #tpu.memory_space<vmem>>, %arg3: memref<1x256xf32, #tpu.memory_space<vmem>>, %arg4: memref<5x128x256xbf16, #tpu.memory_space<vmem>>, %arg5: memref<1x256xf32, #tpu.memory_space<vmem>>, %arg6: memref<512x50xbf16, #tpu.memory_space<vmem>>, %arg7: memref<1x50xf32, #tpu.memory_space<vmem>>, %arg8: memref<50x10xbf16, #tpu.memory_space<vmem>>, %arg9: memref<1x10xf32, #tpu.memory_space<vmem>>, %arg10: memref<2x50xf32, #tpu.memory_space<vmem>>, %arg11: memref<2x10xf32, #tpu.memory_space<vmem>>) attributes {dimension_semantics = [#tpu.dimension_semantics<parallel>], iteration_bounds = array<i64: 1>, scalar_prefetch = 0 : i64, scratch_operands = 0 : i64, tpu.core_type = #tpu.core_type<tc>, window_params = [{transform_indices = @transform_0, window_bounds = array<i64: 2, 28, 28>}, {pipeline_mode = #tpu.pipeline_mode<synchronous>, transform_indices = @transform_1, window_bounds = array<i64: 5, 28, 256>}, {pipeline_mode = #tpu.pipeline_mode<synchronous>, transform_indices = @transform_2, window_bounds = array<i64: 1, 256>}, {pipeline_mode = #tpu.pipeline_mode<synchronous>, transform_indices = @transform_3, window_bounds = array<i64: 5, 128, 256>}, {pipeline_mode = #tpu.pipeline_mode<synchronous>, transform_indices = @transform_4, window_bounds = array<i64: 1, 256>}, {pipeline_mode = #tpu.pipeline_mode<synchronous>, transform_indices = @transform_5, window_bounds = array<i64: 512, 50>}, {pipeline_mode = #tpu.pipeline_mode<synchronous>, transform_indices = @transform_6, window_bounds = array<i64: 1, 50>}, {pipeline_mode = #tpu.pipeline_mode<synchronous>, transform_indices = @transform_7, window_bounds = array<i64: 50, 10>}, {pipeline_mode = #tpu.pipeline_mode<synchronous>, transform_indices = @transform_8, window_bounds = array<i64: 1, 10>}, {transform_indices = @transform_9, window_bounds = array<i64: 2, 50>}, {transform_indices = @transform_10, window_bounds = array<i64: 2, 10>}]} {
    %c0 = arith.constant 0 : index
    %c0_0 = arith.constant 0 : index
    %c0_1 = arith.constant 0 : index
    %0 = vector.load %arg1[%c0, %c0_0, %c0_1] : memref<2x28x28xbf16, #tpu.memory_space<vmem>>, vector<2x28x28xbf16>
    %1 = arith.extf %0 : vector<2x28x28xbf16> to vector<2x28x28xf32>
    %2 = vector.extract_strided_slice %1 {offsets = [0, 0, 0], sizes = [2, 24, 28], strides = [1, 1, 1]} : vector<2x28x28xf32> to vector<2x24x28xf32>
    %3 = vector.shape_cast %2 : vector<2x24x28xf32> to vector<48x28xf32>
    %4 = arith.truncf %3 : vector<48x28xf32> to vector<48x28xbf16>
    %c0_2 = arith.constant 0 : index
    %c0_3 = arith.constant 0 : index
    %c0_4 = arith.constant 0 : index
    %5 = vector.load %arg2[%c0_2, %c0_3, %c0_4] : memref<5x28x256xbf16, #tpu.memory_space<vmem>>, vector<1x28x256xbf16>
    %6 = vector.shape_cast %5 : vector<1x28x256xbf16> to vector<28x256xbf16>
    %cst = arith.constant dense<0.000000e+00> : vector<48x256xf32>
    %7 = tpu.matmul %4, %6, %cst {dimension_numbers = #tpu.dot_dimension_numbers<[1], [0], [0], [1], [0, 0, 1, 1], [], []>} : vector<48x28xbf16>, vector<28x256xbf16>, vector<48x256xf32> -> vector<48x256xf32>
    %8 = vector.extract_strided_slice %1 {offsets = [0, 1, 0], sizes = [2, 24, 28], strides = [1, 1, 1]} : vector<2x28x28xf32> to vector<2x24x28xf32>
    %9 = vector.shape_cast %8 : vector<2x24x28xf32> to vector<48x28xf32>
    %10 = arith.truncf %9 : vector<48x28xf32> to vector<48x28xbf16>
    %c1 = arith.constant 1 : index
    %c0_5 = arith.constant 0 : index
    %c0_6 = arith.constant 0 : index
    %11 = vector.load %arg2[%c1, %c0_5, %c0_6] : memref<5x28x256xbf16, #tpu.memory_space<vmem>>, vector<1x28x256xbf16>
    %12 = vector.shape_cast %11 : vector<1x28x256xbf16> to vector<28x256xbf16>
    %cst_7 = arith.constant dense<0.000000e+00> : vector<48x256xf32>
    %13 = tpu.matmul %10, %12, %cst_7 {dimension_numbers = #tpu.dot_dimension_numbers<[1], [0], [0], [1], [0, 0, 1, 1], [], []>} : vector<48x28xbf16>, vector<28x256xbf16>, vector<48x256xf32> -> vector<48x256xf32>
    %14 = arith.addf %7, %13 : vector<48x256xf32>
    %15 = vector.extract_strided_slice %1 {offsets = [0, 2, 0], sizes = [2, 24, 28], strides = [1, 1, 1]} : vector<2x28x28xf32> to vector<2x24x28xf32>
    %16 = vector.shape_cast %15 : vector<2x24x28xf32> to vector<48x28xf32>
    %17 = arith.truncf %16 : vector<48x28xf32> to vector<48x28xbf16>
    %c2 = arith.constant 2 : index
    %c0_8 = arith.constant 0 : index
    %c0_9 = arith.constant 0 : index
    %18 = vector.load %arg2[%c2, %c0_8, %c0_9] : memref<5x28x256xbf16, #tpu.memory_space<vmem>>, vector<1x28x256xbf16>
    %19 = vector.shape_cast %18 : vector<1x28x256xbf16> to vector<28x256xbf16>
    %cst_10 = arith.constant dense<0.000000e+00> : vector<48x256xf32>
    %20 = tpu.matmul %17, %19, %cst_10 {dimension_numbers = #tpu.dot_dimension_numbers<[1], [0], [0], [1], [0, 0, 1, 1], [], []>} : vector<48x28xbf16>, vector<28x256xbf16>, vector<48x256xf32> -> vector<48x256xf32>
    %21 = arith.addf %14, %20 : vector<48x256xf32>
    %22 = vector.extract_strided_slice %1 {offsets = [0, 3, 0], sizes = [2, 24, 28], strides = [1, 1, 1]} : vector<2x28x28xf32> to vector<2x24x28xf32>
    %23 = vector.shape_cast %22 : vector<2x24x28xf32> to vector<48x28xf32>
    %24 = arith.truncf %23 : vector<48x28xf32> to vector<48x28xbf16>
    %c3 = arith.constant 3 : index
    %c0_11 = arith.constant 0 : index
    %c0_12 = arith.constant 0 : index
    %25 = vector.load %arg2[%c3, %c0_11, %c0_12] : memref<5x28x256xbf16, #tpu.memory_space<vmem>>, vector<1x28x256xbf16>
    %26 = vector.shape_cast %25 : vector<1x28x256xbf16> to vector<28x256xbf16>
    %cst_13 = arith.constant dense<0.000000e+00> : vector<48x256xf32>
    %27 = tpu.matmul %24, %26, %cst_13 {dimension_numbers = #tpu.dot_dimension_numbers<[1], [0], [0], [1], [0, 0, 1, 1], [], []>} : vector<48x28xbf16>, vector<28x256xbf16>, vector<48x256xf32> -> vector<48x256xf32>
    %28 = arith.addf %21, %27 : vector<48x256xf32>
    %29 = vector.extract_strided_slice %1 {offsets = [0, 4, 0], sizes = [2, 24, 28], strides = [1, 1, 1]} : vector<2x28x28xf32> to vector<2x24x28xf32>
    %30 = vector.shape_cast %29 : vector<2x24x28xf32> to vector<48x28xf32>
    %31 = arith.truncf %30 : vector<48x28xf32> to vector<48x28xbf16>
    %c4 = arith.constant 4 : index
    %c0_14 = arith.constant 0 : index
    %c0_15 = arith.constant 0 : index
    %32 = vector.load %arg2[%c4, %c0_14, %c0_15] : memref<5x28x256xbf16, #tpu.memory_space<vmem>>, vector<1x28x256xbf16>
    %33 = vector.shape_cast %32 : vector<1x28x256xbf16> to vector<28x256xbf16>
    %cst_16 = arith.constant dense<0.000000e+00> : vector<48x256xf32>
    %34 = tpu.matmul %31, %33, %cst_16 {dimension_numbers = #tpu.dot_dimension_numbers<[1], [0], [0], [1], [0, 0, 1, 1], [], []>} : vector<48x28xbf16>, vector<28x256xbf16>, vector<48x256xf32> -> vector<48x256xf32>
    %35 = arith.addf %28, %34 : vector<48x256xf32>
    %c0_17 = arith.constant 0 : index
    %c0_18 = arith.constant 0 : index
    %36 = vector.load %arg3[%c0_17, %c0_18] : memref<1x256xf32, #tpu.memory_space<vmem>>, vector<1x256xf32>
    %37 = vector.broadcast %36 : vector<1x256xf32> to vector<48x256xf32>
    %38 = arith.addf %35, %37 : vector<48x256xf32>
    %cst_19 = arith.constant 0.000000e+00 : f32
    %39 = vector.broadcast %cst_19 : f32 to vector<48x256xf32>
    %40 = arith.maximumf %38, %39 : vector<48x256xf32>
    %41 = vector.extract_strided_slice %40 {offsets = [0, 0], sizes = [48, 128], strides = [1, 1]} : vector<48x256xf32> to vector<48x128xf32>
    %42 = vector.extract_strided_slice %40 {offsets = [0, 128], sizes = [48, 128], strides = [1, 1]} : vector<48x256xf32> to vector<48x128xf32>
    %43 = arith.maximumf %41, %42 : vector<48x128xf32>
    %44 = vector.shape_cast %43 : vector<48x128xf32> to vector<2x12x2x128xf32>
    %45 = vector.extract_strided_slice %44 {offsets = [0, 0, 0, 0], sizes = [2, 12, 1, 128], strides = [1, 1, 1, 1]} : vector<2x12x2x128xf32> to vector<2x12x1x128xf32>
    %46 = vector.shape_cast %45 : vector<2x12x1x128xf32> to vector<2x12x128xf32>
    %47 = vector.extract_strided_slice %44 {offsets = [0, 0, 1, 0], sizes = [2, 12, 1, 128], strides = [1, 1, 1, 1]} : vector<2x12x2x128xf32> to vector<2x12x1x128xf32>
    %48 = vector.shape_cast %47 : vector<2x12x1x128xf32> to vector<2x12x128xf32>
    %49 = arith.maximumf %46, %48 : vector<2x12x128xf32>
    %50 = vector.extract_strided_slice %49 {offsets = [0, 0, 0], sizes = [2, 8, 128], strides = [1, 1, 1]} : vector<2x12x128xf32> to vector<2x8x128xf32>
    %51 = vector.shape_cast %50 : vector<2x8x128xf32> to vector<16x128xf32>
    %52 = arith.truncf %51 : vector<16x128xf32> to vector<16x128xbf16>
    %c0_20 = arith.constant 0 : index
    %c0_21 = arith.constant 0 : index
    %c0_22 = arith.constant 0 : index
    %53 = vector.load %arg4[%c0_20, %c0_21, %c0_22] : memref<5x128x256xbf16, #tpu.memory_space<vmem>>, vector<1x128x256xbf16>
    %54 = vector.shape_cast %53 : vector<1x128x256xbf16> to vector<128x256xbf16>
    %cst_23 = arith.constant dense<0.000000e+00> : vector<16x256xf32>
    %55 = tpu.matmul %52, %54, %cst_23 {dimension_numbers = #tpu.dot_dimension_numbers<[1], [0], [0], [1], [0, 0, 1, 1], [], []>} : vector<16x128xbf16>, vector<128x256xbf16>, vector<16x256xf32> -> vector<16x256xf32>
    %56 = vector.extract_strided_slice %49 {offsets = [0, 1, 0], sizes = [2, 8, 128], strides = [1, 1, 1]} : vector<2x12x128xf32> to vector<2x8x128xf32>
    %57 = vector.shape_cast %56 : vector<2x8x128xf32> to vector<16x128xf32>
    %58 = arith.truncf %57 : vector<16x128xf32> to vector<16x128xbf16>
    %c1_24 = arith.constant 1 : index
    %c0_25 = arith.constant 0 : index
    %c0_26 = arith.constant 0 : index
    %59 = vector.load %arg4[%c1_24, %c0_25, %c0_26] : memref<5x128x256xbf16, #tpu.memory_space<vmem>>, vector<1x128x256xbf16>
    %60 = vector.shape_cast %59 : vector<1x128x256xbf16> to vector<128x256xbf16>
    %cst_27 = arith.constant dense<0.000000e+00> : vector<16x256xf32>
    %61 = tpu.matmul %58, %60, %cst_27 {dimension_numbers = #tpu.dot_dimension_numbers<[1], [0], [0], [1], [0, 0, 1, 1], [], []>} : vector<16x128xbf16>, vector<128x256xbf16>, vector<16x256xf32> -> vector<16x256xf32>
    %62 = arith.addf %55, %61 : vector<16x256xf32>
    %63 = vector.extract_strided_slice %49 {offsets = [0, 2, 0], sizes = [2, 8, 128], strides = [1, 1, 1]} : vector<2x12x128xf32> to vector<2x8x128xf32>
    %64 = vector.shape_cast %63 : vector<2x8x128xf32> to vector<16x128xf32>
    %65 = arith.truncf %64 : vector<16x128xf32> to vector<16x128xbf16>
    %c2_28 = arith.constant 2 : index
    %c0_29 = arith.constant 0 : index
    %c0_30 = arith.constant 0 : index
    %66 = vector.load %arg4[%c2_28, %c0_29, %c0_30] : memref<5x128x256xbf16, #tpu.memory_space<vmem>>, vector<1x128x256xbf16>
    %67 = vector.shape_cast %66 : vector<1x128x256xbf16> to vector<128x256xbf16>
    %cst_31 = arith.constant dense<0.000000e+00> : vector<16x256xf32>
    %68 = tpu.matmul %65, %67, %cst_31 {dimension_numbers = #tpu.dot_dimension_numbers<[1], [0], [0], [1], [0, 0, 1, 1], [], []>} : vector<16x128xbf16>, vector<128x256xbf16>, vector<16x256xf32> -> vector<16x256xf32>
    %69 = arith.addf %62, %68 : vector<16x256xf32>
    %70 = vector.extract_strided_slice %49 {offsets = [0, 3, 0], sizes = [2, 8, 128], strides = [1, 1, 1]} : vector<2x12x128xf32> to vector<2x8x128xf32>
    %71 = vector.shape_cast %70 : vector<2x8x128xf32> to vector<16x128xf32>
    %72 = arith.truncf %71 : vector<16x128xf32> to vector<16x128xbf16>
    %c3_32 = arith.constant 3 : index
    %c0_33 = arith.constant 0 : index
    %c0_34 = arith.constant 0 : index
    %73 = vector.load %arg4[%c3_32, %c0_33, %c0_34] : memref<5x128x256xbf16, #tpu.memory_space<vmem>>, vector<1x128x256xbf16>
    %74 = vector.shape_cast %73 : vector<1x128x256xbf16> to vector<128x256xbf16>
    %cst_35 = arith.constant dense<0.000000e+00> : vector<16x256xf32>
    %75 = tpu.matmul %72, %74, %cst_35 {dimension_numbers = #tpu.dot_dimension_numbers<[1], [0], [0], [1], [0, 0, 1, 1], [], []>} : vector<16x128xbf16>, vector<128x256xbf16>, vector<16x256xf32> -> vector<16x256xf32>
    %76 = arith.addf %69, %75 : vector<16x256xf32>
    %77 = vector.extract_strided_slice %49 {offsets = [0, 4, 0], sizes = [2, 8, 128], strides = [1, 1, 1]} : vector<2x12x128xf32> to vector<2x8x128xf32>
    %78 = vector.shape_cast %77 : vector<2x8x128xf32> to vector<16x128xf32>
    %79 = arith.truncf %78 : vector<16x128xf32> to vector<16x128xbf16>
    %c4_36 = arith.constant 4 : index
    %c0_37 = arith.constant 0 : index
    %c0_38 = arith.constant 0 : index
    %80 = vector.load %arg4[%c4_36, %c0_37, %c0_38] : memref<5x128x256xbf16, #tpu.memory_space<vmem>>, vector<1x128x256xbf16>
    %81 = vector.shape_cast %80 : vector<1x128x256xbf16> to vector<128x256xbf16>
    %cst_39 = arith.constant dense<0.000000e+00> : vector<16x256xf32>
    %82 = tpu.matmul %79, %81, %cst_39 {dimension_numbers = #tpu.dot_dimension_numbers<[1], [0], [0], [1], [0, 0, 1, 1], [], []>} : vector<16x128xbf16>, vector<128x256xbf16>, vector<16x256xf32> -> vector<16x256xf32>
    %83 = arith.addf %76, %82 : vector<16x256xf32>
    %c0_40 = arith.constant 0 : index
    %c0_41 = arith.constant 0 : index
    %84 = vector.load %arg5[%c0_40, %c0_41] : memref<1x256xf32, #tpu.memory_space<vmem>>, vector<1x256xf32>
    %85 = vector.broadcast %84 : vector<1x256xf32> to vector<16x256xf32>
    %86 = arith.addf %83, %85 : vector<16x256xf32>
    %cst_42 = arith.constant 0.000000e+00 : f32
    %87 = vector.broadcast %cst_42 : f32 to vector<16x256xf32>
    %88 = arith.maximumf %86, %87 : vector<16x256xf32>
    %89 = vector.extract_strided_slice %88 {offsets = [0, 0], sizes = [16, 128], strides = [1, 1]} : vector<16x256xf32> to vector<16x128xf32>
    %90 = vector.extract_strided_slice %88 {offsets = [0, 128], sizes = [16, 128], strides = [1, 1]} : vector<16x256xf32> to vector<16x128xf32>
    %91 = arith.maximumf %89, %90 : vector<16x128xf32>
    %92 = vector.shape_cast %91 : vector<16x128xf32> to vector<2x4x2x128xf32>
    %93 = vector.extract_strided_slice %92 {offsets = [0, 0, 0, 0], sizes = [2, 4, 1, 128], strides = [1, 1, 1, 1]} : vector<2x4x2x128xf32> to vector<2x4x1x128xf32>
    %94 = vector.shape_cast %93 : vector<2x4x1x128xf32> to vector<2x4x128xf32>
    %95 = vector.extract_strided_slice %92 {offsets = [0, 0, 1, 0], sizes = [2, 4, 1, 128], strides = [1, 1, 1, 1]} : vector<2x4x2x128xf32> to vector<2x4x1x128xf32>
    %96 = vector.shape_cast %95 : vector<2x4x1x128xf32> to vector<2x4x128xf32>
    %97 = arith.maximumf %94, %96 : vector<2x4x128xf32>
    %98 = vector.shape_cast %97 : vector<2x4x128xf32> to vector<2x512xf32>
    %99 = arith.truncf %98 : vector<2x512xf32> to vector<2x512xbf16>
    %c0_43 = arith.constant 0 : index
    %c0_44 = arith.constant 0 : index
    %100 = vector.load %arg6[%c0_43, %c0_44] : memref<512x50xbf16, #tpu.memory_space<vmem>>, vector<512x50xbf16>
    %cst_45 = arith.constant dense<0.000000e+00> : vector<2x50xf32>
    %101 = tpu.matmul %99, %100, %cst_45 {dimension_numbers = #tpu.dot_dimension_numbers<[1], [0], [0], [1], [0, 0, 1, 1], [], []>} : vector<2x512xbf16>, vector<512x50xbf16>, vector<2x50xf32> -> vector<2x50xf32>
    %c0_46 = arith.constant 0 : index
    %c0_47 = arith.constant 0 : index
    %102 = vector.load %arg7[%c0_46, %c0_47] : memref<1x50xf32, #tpu.memory_space<vmem>>, vector<1x50xf32>
    %103 = vector.broadcast %102 : vector<1x50xf32> to vector<2x50xf32>
    %104 = arith.addf %101, %103 : vector<2x50xf32>
    %cst_48 = arith.constant 0.000000e+00 : f32
    %105 = vector.broadcast %cst_48 : f32 to vector<2x50xf32>
    %106 = arith.maximumf %104, %105 : vector<2x50xf32>
    %c0_49 = arith.constant 0 : index
    %c0_50 = arith.constant 0 : index
    %107 = vector.load %arg10[%c0_49, %c0_50] : memref<2x50xf32, #tpu.memory_space<vmem>>, vector<2x50xf32>
    %108 = arith.mulf %106, %107 : vector<2x50xf32>
    %109 = arith.truncf %108 : vector<2x50xf32> to vector<2x50xbf16>
    %c0_51 = arith.constant 0 : index
    %c0_52 = arith.constant 0 : index
    %110 = vector.load %arg8[%c0_51, %c0_52] : memref<50x10xbf16, #tpu.memory_space<vmem>>, vector<50x10xbf16>
    %cst_53 = arith.constant dense<0.000000e+00> : vector<2x10xf32>
    %111 = tpu.matmul %109, %110, %cst_53 {dimension_numbers = #tpu.dot_dimension_numbers<[1], [0], [0], [1], [0, 0, 1, 1], [], []>} : vector<2x50xbf16>, vector<50x10xbf16>, vector<2x10xf32> -> vector<2x10xf32>
    %c0_54 = arith.constant 0 : index
    %c0_55 = arith.constant 0 : index
    %112 = vector.load %arg9[%c0_54, %c0_55] : memref<1x10xf32, #tpu.memory_space<vmem>>, vector<1x10xf32>
    %113 = vector.broadcast %112 : vector<1x10xf32> to vector<2x10xf32>
    %114 = arith.addf %111, %113 : vector<2x10xf32>
    %c0_56 = arith.constant 0 : index
    %c0_57 = arith.constant 0 : index
    %115 = vector.load %arg11[%c0_56, %c0_57] : memref<2x10xf32, #tpu.memory_space<vmem>>, vector<2x10xf32>
    tpu.vector_store %arg11[%c0_56, %c0_57], %114 {strides = array<i32>} : memref<2x10xf32, #tpu.memory_space<vmem>>, vector<2x10xf32>,
    return
  }
  func.func @transform_0(%arg0: i32) -> (i32, i32, i32) {
    %c0_i32 = arith.constant 0 : i32
    %c0_i32_0 = arith.constant 0 : i32
    %c0_i32_1 = arith.constant 0 : i32
    return %arg0, %c0_i32, %c0_i32_0 : i32, i32, i32
  }
  func.func @transform_1(%arg0: i32) -> (i32, i32, i32) {
    %c0_i32 = arith.constant 0 : i32
    %c0_i32_0 = arith.constant 0 : i32
    %c0_i32_1 = arith.constant 0 : i32
    %c0_i32_2 = arith.constant 0 : i32
    return %c0_i32, %c0_i32_0, %c0_i32_1 : i32, i32, i32
  }
  func.func @transform_2(%arg0: i32) -> (i32, i32) {
    %c0_i32 = arith.constant 0 : i32
    %c0_i32_0 = arith.constant 0 : i32
    %c0_i32_1 = arith.constant 0 : i32
    return %c0_i32, %c0_i32_0 : i32, i32
  }
  func.func @transform_3(%arg0: i32) -> (i32, i32, i32) {
    %c0_i32 = arith.constant 0 : i32
    %c0_i32_0 = arith.constant 0 : i32
    %c0_i32_1 = arith.constant 0 : i32
    %c0_i32_2 = arith.constant 0 : i32
    return %c0_i32, %c0_i32_0, %c0_i32_1 : i32, i32, i32
  }
  func.func @transform_4(%arg0: i32) -> (i32, i32) {
    %c0_i32 = arith.constant 0 : i32
    %c0_i32_0 = arith.constant 0 : i32
    %c0_i32_1 = arith.constant 0 : i32
    return %c0_i32, %c0_i32_0 : i32, i32
  }
  func.func @transform_5(%arg0: i32) -> (i32, i32) {
    %c0_i32 = arith.constant 0 : i32
    %c0_i32_0 = arith.constant 0 : i32
    %c0_i32_1 = arith.constant 0 : i32
    return %c0_i32, %c0_i32_0 : i32, i32
  }
  func.func @transform_6(%arg0: i32) -> (i32, i32) {
    %c0_i32 = arith.constant 0 : i32
    %c0_i32_0 = arith.constant 0 : i32
    %c0_i32_1 = arith.constant 0 : i32
    return %c0_i32, %c0_i32_0 : i32, i32
  }
  func.func @transform_7(%arg0: i32) -> (i32, i32) {
    %c0_i32 = arith.constant 0 : i32
    %c0_i32_0 = arith.constant 0 : i32
    %c0_i32_1 = arith.constant 0 : i32
    return %c0_i32, %c0_i32_0 : i32, i32
  }
  func.func @transform_8(%arg0: i32) -> (i32, i32) {
    %c0_i32 = arith.constant 0 : i32
    %c0_i32_0 = arith.constant 0 : i32
    %c0_i32_1 = arith.constant 0 : i32
    return %c0_i32, %c0_i32_0 : i32, i32
  }
  func.func @transform_9(%arg0: i32) -> (i32, i32) {
    %c0_i32 = arith.constant 0 : i32
    %c0_i32_0 = arith.constant 0 : i32
    return %arg0, %c0_i32 : i32, i32
  }
  func.func @transform_10(%arg0: i32) -> (i32, i32) {
    %c0_i32 = arith.constant 0 : i32
    %c0_i32_0 = arith.constant 0 : i32
    return %arg0, %c0_i32 : i32, i32
  }
}

</mosaic_0001>

<llo_original>
// kernel: cnn_forward.1
$region0: #{cnn_forward.1}
  #allocation0 [shape = 'u32[]', space=smem, size = 0x4, offset = 0x4, fixed_abs, tag = 'smem constant byte address 0x4 - core index']
  #allocation1 [shape = 'u32[72,128]{1,0:T(1,128)}', space=vmem, size = 0x9000, scoped, tag = 'internal scratch']
  %s0 = inlined_call_operand.vmem [shape: bf16[2,28,28], index: 0, kind: input, shape index: {}]
  %s1 = inlined_call_operand.vmem [shape: bf16[5,28,256], index: 1, kind: input, shape index: {}]
  %s2 = inlined_call_operand.vmem [shape: f32[1,256], index: 2, kind: input, shape index: {}]
  %s3 = inlined_call_operand.vmem [shape: bf16[5,128,256], index: 3, kind: input, shape index: {}]
  %s4 = inlined_call_operand.vmem [shape: f32[1,256], index: 4, kind: input, shape index: {}]
  %s5 = inlined_call_operand.vmem [shape: bf16[512,50], index: 5, kind: input, shape index: {}]
  %s6 = inlined_call_operand.vmem [shape: f32[1,50], index: 6, kind: input, shape index: {}]
  %s7 = inlined_call_operand.vmem [shape: bf16[50,10], index: 7, kind: input, shape index: {}]
  %s8 = inlined_call_operand.vmem [shape: f32[1,10], index: 8, kind: input, shape index: {}]
  %s9 = inlined_call_operand.vmem [shape: f32[2,50], index: 9, kind: input, shape index: {}]
  %s10 = inlined_call_operand.hbm [shape: f32[2,10], index: 10, kind: output, shape index: {}]
  %s11 = sld [smem:[#allocation0]]
  $region50: #{cnn_forward.1} parent=0
    _
  %s13 = ssub.s32 1, %s11
  %s14 = scalar_select 0, %s13, %s11
  $region1: #{cnn_forward.1} parent=0
    #allocation2 [shape = 'u8[1024]{0}', space=vmem, size = 0x400, scoped, tag = 'output window, operand 0, single buffered']
    #allocation3 [shape = 's32[1]{0}', space=sflag, size = 0x4, scoped, tag = 'scoped memory for cnn_forward.1']
    %15 = vsyncpa [#allocation3], 0
    // Predicated region
    $region2: #{cnn_forward.1} parent=1 // pred_check
      _
    $region3: #{cnn_forward.1} parent=1 // pred_check_branch
      %17 = sbr.rel (0) target = $region5
    $region4: #{cnn_forward.1} parent=1 // pred_region
      _
    $region5: #{cnn_forward.1} parent=1 // pred_fallthru
      _
    // Predicated region
    $region6: #{cnn_forward.1} parent=1 // pred_check
      _
    $region7: #{cnn_forward.1} parent=1 // pred_check_branch
      %19 = sbr.rel (0) target = $region9
    $region8: #{cnn_forward.1} parent=1 // pred_region
      _
    $region9: #{cnn_forward.1} parent=1 // pred_fallthru
      _
    // Predicated region
    $region10: #{cnn_forward.1} parent=1 // pred_check
      _
    $region11: #{cnn_forward.1} parent=1 // pred_check_branch
      %21 = sbr.rel (0) target = $region13
    $region12: #{cnn_forward.1} parent=1 // pred_region
      _
    $region13: #{cnn_forward.1} parent=1 // pred_fallthru
      _
    // Predicated region
    $region14: #{cnn_forward.1} parent=1 // pred_check
      _
    $region15: #{cnn_forward.1} parent=1 // pred_check_branch
      %23 = sbr.rel (0) target = $region17
    $region16: #{cnn_forward.1} parent=1 // pred_region
      _
    $region17: #{cnn_forward.1} parent=1 // pred_fallthru
      _
    // Predicated region
    $region18: #{cnn_forward.1} parent=1 // pred_check
      _
    $region19: #{cnn_forward.1} parent=1 // pred_check_branch
      %25 = sbr.rel (0) target = $region21
    $region20: #{cnn_forward.1} parent=1 // pred_region
      _
    $region21: #{cnn_forward.1} parent=1 // pred_fallthru
      _
    // Predicated region
    $region22: #{cnn_forward.1} parent=1 // pred_check
      _
    $region23: #{cnn_forward.1} parent=1 // pred_check_branch
      %27 = sbr.rel (0) target = $region25
    $region24: #{cnn_forward.1} parent=1 // pred_region
      _
    $region25: #{cnn_forward.1} parent=1 // pred_fallthru
      _
    // Predicated region
    $region26: #{cnn_forward.1} parent=1 // pred_check
      _
    $region27: #{cnn_forward.1} parent=1 // pred_check_branch
      %29 = sbr.rel (0) target = $region29
    $region28: #{cnn_forward.1} parent=1 // pred_region
      _
    $region29: #{cnn_forward.1} parent=1 // pred_fallthru
      _
    // Predicated region
    $region30: #{cnn_forward.1} parent=1 // pred_check
      _
    $region31: #{cnn_forward.1} parent=1 // pred_check_branch
      %31 = sbr.rel (0) target = $region33
    $region32: #{cnn_forward.1} parent=1 // pred_region
      _
    $region33: #{cnn_forward.1} parent=1 // pred_fallthru
      _
    // Predicated region
    $region34: #{cnn_forward.1} parent=1 // pred_check
      _
    $region35: #{cnn_forward.1} parent=1 // pred_check_branch
      %33 = sbr.rel (0) target = $region37
    $region36: #{cnn_forward.1} parent=1 // pred_region
      _
    $region37: #{cnn_forward.1} parent=1 // pred_fallthru
      _
    // Predicated region
    $region38: #{cnn_forward.1} parent=1 // pred_check
      _
    $region39: #{cnn_forward.1} parent=1 // pred_check_branch
      %35 = sbr.rel (0) target = $region41
    $region40: #{cnn_forward.1} parent=1 // pred_region
      _
    $region41: #{cnn_forward.1} parent=1 // pred_fallthru
      _
    %v37 = vld [vmem:[%s0] sm:$0xf]
    %v38 = vld [vmem:[%s0 + $0x4] sm:$0xf]
    %v39 = vld [vmem:[%s0 + $0x8] sm:$0xf]
    %v40 = vld [vmem:[%s0 + $0xc] sm:$0x3]
    %v41 = vld [vmem:[%s0 + $0x10] sm:$0xf]
    %v42 = vld [vmem:[%s0 + $0x14] sm:$0xf]
    %v43 = vld [vmem:[%s0 + $0x18] sm:$0xf]
    %v44 = vld [vmem:[%s0 + $0x1c] sm:$0x3]
    %v45 = vunpack.c.l.bf16 %v37
    %v46 = vunpack.c.l.bf16 %v38
    %v47 = vunpack.c.l.bf16 %v39
    %v48 = vunpack.c.l.bf16 %v40
    %v49 = vunpack.c.l.bf16 %v41
    %v50 = vunpack.c.l.bf16 %v42
    %v51 = vunpack.c.l.bf16 %v43
    %v52 = vunpack.c.l.bf16 %v44
    %v53 = vpack.c.bf16 %v46, %v45
    %v54 = vpack.c.bf16 %v49, %v47
    %v55 = vpack.c.bf16 %v51, %v50
    %v56 = vld [vmem:[%s1] sm:$0xff]
    %v57 = vld [vmem:[%s1 + $0x8] sm:$0xff]
    %v58 = vld [vmem:[%s1 + $0x10] sm:$0xff]
    %v59 = vld [vmem:[%s1 + $0x18] sm:$0x33]
    %vm68 = vcmask 1046528
    %v69 = vrot.slane %v45, 1
    %v70 = vrot.slane %v46, 1
    %v71 = vsel %vm68, %v69, %v70
    %v72 = vrot.slane %v47, 1
    %v73 = vsel %vm68, %v70, %v72
    %v74 = vrot.slane %v48, 1
    %v75 = vsel %vm68, %v72, %v74
    %v76 = vrot.slane %v49, 1
    %v77 = vrot.slane %v50, 1
    %v78 = vsel %vm68, %v76, %v77
    %v79 = vrot.slane %v51, 1
    %v80 = vsel %vm68, %v77, %v79
    %v81 = vrot.slane %v52, 1
    %v82 = vsel %vm68, %v79, %v81
    %v89 = vpack.c.bf16 %v73, %v71
    %v90 = vpack.c.bf16 %v78, %v75
    %v91 = vpack.c.bf16 %v82, %v80
    %s92 = scalar_lea.vmem %s1, 32
    %v93 = vld [vmem:[%s92] sm:$0xff]
    %v94 = vld [vmem:[%s92 + $0x8] sm:$0xff]
    %v95 = vld [vmem:[%s92 + $0x10] sm:$0xff]
    %v96 = vld [vmem:[%s92 + $0x18] sm:$0x33]
    %v101 = vunpack.c.l.b16 %v93
    %v102 = vunpack.c.h.b16 %v93
    %v103 = vunpack.c.l.b16 %v94
    %v104 = vunpack.c.h.b16 %v94
    %v105 = vunpack.c.l.b16 %v95
    %v106 = vunpack.c.h.b16 %v95
    %v107 = vunpack.c.l.b16 %v96
    %v108 = vunpack.c.h.b16 %v96
    %v109 = vpack.c.b16 %v103, %v101
    %v110 = vpack.c.b16 %v104, %v102
    %v111 = vpack.c.b16 %v107, %v105
    %v112 = vpack.c.b16 %v108, %v106
    %vm115 = vcmask 228352
    %v117 = vsel %vm115, %v89, 0
    %v120 = vsel %vm115, %v90, 0
    %v123 = vsel %vm115, %v91, 0
    %vm125 = vcmask 1045504
    %v127 = vsel %vm125, %v111, 0
    %v130 = vsel %vm125, %v112, 0
    %132 = vmatpush.bf16.msra.mxu0 0
    %133 = vmatpush.bf16.msra.mxu0 0
    %134 = vmatpush.bf16.msra.mxu0 0
    %135 = vmatpush.bf16.msra.mxu0 0
    %136 = vmatpush.bf16.msra.mxu0 0
    %137 = vmatpush.bf16.msra.mxu0 0
    %138 = vmatpush.bf16.msra.mxu0 %v127
    %139 = vmatpush.bf16.msra.mxu0 %v109
    %140 = vmatmul.bf16.gmra.mxu0 %v117
    %v141 = vpop.f32.mrf.mxu0
    %v142 = vadd.f32 0.0, %v141
    %v143 = vpop.f32.mrf.mxu0
    %v144 = vadd.f32 0.0, %v143
    %145 = vmatmul.bf16.gmra.mxu0 %v120
    %v146 = vpop.f32.mrf.mxu0
    %v147 = vadd.f32 0.0, %v146
    %v148 = vpop.f32.mrf.mxu0
    %v149 = vadd.f32 0.0, %v148
    %150 = vmatmul.bf16.gmra.mxu0 %v123
    %v151 = vpop.f32.mrf.mxu0
    %v152 = vadd.f32 0.0, %v151
    %v153 = vpop.f32.mrf.mxu0
    %v154 = vadd.f32 0.0, %v153
    %155 = vdwg.mxu0
    %156 = vmatpush.bf16.msra.mxu0 0
    %157 = vmatpush.bf16.msra.mxu0 0
    %158 = vmatpush.bf16.msra.mxu0 0
    %159 = vmatpush.bf16.msra.mxu0 0
    %160 = vmatpush.bf16.msra.mxu0 0
    %161 = vmatpush.bf16.msra.mxu0 0
    %162 = vmatpush.bf16.msra.mxu0 %v130
    %163 = vmatpush.bf16.msra.mxu0 %v110
    %164 = vmatmul.bf16.gmra.mxu0 %v117
    %v165 = vpop.f32.mrf.mxu0
    %v166 = vadd.f32 0.0, %v165
    %v167 = vpop.f32.mrf.mxu0
    %v168 = vadd.f32 0.0, %v167
    %169 = vmatmul.bf16.gmra.mxu0 %v120
    %v170 = vpop.f32.mrf.mxu0
    %v171 = vadd.f32 0.0, %v170
    %v172 = vpop.f32.mrf.mxu0
    %v173 = vadd.f32 0.0, %v172
    %174 = vmatmul.bf16.gmra.mxu0 %v123
    %v175 = vpop.f32.mrf.mxu0
    %v176 = vadd.f32 0.0, %v175
    %v177 = vpop.f32.mrf.mxu0
    %v178 = vadd.f32 0.0, %v177
    %179 = vdwg.mxu0
    %v184 = vunpack.c.l.b16 %v56
    %v185 = vunpack.c.h.b16 %v56
    %v186 = vunpack.c.l.b16 %v57
    %v187 = vunpack.c.h.b16 %v57
    %v188 = vunpack.c.l.b16 %v58
    %v189 = vunpack.c.h.b16 %v58
    %v190 = vunpack.c.l.b16 %v59
    %v191 = vunpack.c.h.b16 %v59
    %v192 = vpack.c.b16 %v186, %v184
    %v193 = vpack.c.b16 %v187, %v185
    %v194 = vpack.c.b16 %v190, %v188
    %v195 = vpack.c.b16 %v191, %v189
    %v199 = vsel %vm115, %v53, 0
    %v202 = vsel %vm115, %v54, 0
    %v205 = vsel %vm115, %v55, 0
    %v208 = vsel %vm125, %v194, 0
    %v211 = vsel %vm125, %v195, 0
    %213 = vmatpush.bf16.msra.mxu0 0
    %214 = vmatpush.bf16.msra.mxu0 0
    %215 = vmatpush.bf16.msra.mxu0 0
    %216 = vmatpush.bf16.msra.mxu0 0
    %217 = vmatpush.bf16.msra.mxu0 0
    %218 = vmatpush.bf16.msra.mxu0 0
    %219 = vmatpush.bf16.msra.mxu0 %v208
    %220 = vmatpush.bf16.msra.mxu0 %v192
    %221 = vmatmul.bf16.gmra.mxu0 %v199
    %v222 = vpop.f32.mrf.mxu0
    %v223 = vadd.f32 %v142, %v222
    %v224 = vpop.f32.mrf.mxu0
    %v225 = vadd.f32 %v144, %v224
    %226 = vmatmul.bf16.gmra.mxu0 %v202
    %v227 = vpop.f32.mrf.mxu0
    %v228 = vadd.f32 %v147, %v227
    %v229 = vpop.f32.mrf.mxu0
    %v230 = vadd.f32 %v149, %v229
    %231 = vmatmul.bf16.gmra.mxu0 %v205
    %v232 = vpop.f32.mrf.mxu0
    %v233 = vadd.f32 %v152, %v232
    %v234 = vpop.f32.mrf.mxu0
    %v235 = vadd.f32 %v154, %v234
    %236 = vdwg.mxu0
    %237 = vmatpush.bf16.msra.mxu0 0
    %238 = vmatpush.bf16.msra.mxu0 0
    %239 = vmatpush.bf16.msra.mxu0 0
    %240 = vmatpush.bf16.msra.mxu0 0
    %241 = vmatpush.bf16.msra.mxu0 0
    %242 = vmatpush.bf16.msra.mxu0 0
    %243 = vmatpush.bf16.msra.mxu0 %v211
    %244 = vmatpush.bf16.msra.mxu0 %v193
    %245 = vmatmul.bf16.gmra.mxu0 %v199
    %v246 = vpop.f32.mrf.mxu0
    %v247 = vadd.f32 %v166, %v246
    %v248 = vpop.f32.mrf.mxu0
    %v249 = vadd.f32 %v168, %v248
    %250 = vmatmul.bf16.gmra.mxu0 %v202
    %v251 = vpop.f32.mrf.mxu0
    %v252 = vadd.f32 %v171, %v251
    %v253 = vpop.f32.mrf.mxu0
    %v254 = vadd.f32 %v173, %v253
    %255 = vmatmul.bf16.gmra.mxu0 %v205
    %v256 = vpop.f32.mrf.mxu0
    %v257 = vadd.f32 %v176, %v256
    %v258 = vpop.f32.mrf.mxu0
    %v259 = vadd.f32 %v178, %v258
    %260 = vdwg.mxu0
    %v261 = vrot.slane %v45, 2
    %v262 = vrot.slane %v46, 2
    %v263 = vsel %vm125, %v261, %v262
    %v264 = vrot.slane %v47, 2
    %v265 = vsel %vm125, %v262, %v264
    %v266 = vrot.slane %v48, 2
    %v267 = vsel %vm125, %v264, %v266
    %v268 = vrot.slane %v49, 2
    %v269 = vrot.slane %v50, 2
    %v270 = vsel %vm125, %v268, %v269
    %v271 = vrot.slane %v51, 2
    %v272 = vsel %vm125, %v269, %v271
    %v273 = vrot.slane %v52, 2
    %v274 = vsel %vm125, %v271, %v273
    %v281 = vpack.c.bf16 %v265, %v263
    %v282 = vpack.c.bf16 %v270, %v267
    %v283 = vpack.c.bf16 %v274, %v272
    %s284 = scalar_lea.vmem %s1, 64
    %v285 = vld [vmem:[%s284] sm:$0xff]
    %v286 = vld [vmem:[%s284 + $0x8] sm:$0xff]
    %v287 = vld [vmem:[%s284 + $0x10] sm:$0xff]
    %v288 = vld [vmem:[%s284 + $0x18] sm:$0x33]
    %v293 = vunpack.c.l.b16 %v285
    %v294 = vunpack.c.h.b16 %v285
    %v295 = vunpack.c.l.b16 %v286
    %v296 = vunpack.c.h.b16 %v286
    %v297 = vunpack.c.l.b16 %v287
    %v298 = vunpack.c.h.b16 %v287
    %v299 = vunpack.c.l.b16 %v288
    %v300 = vunpack.c.h.b16 %v288
    %v301 = vpack.c.b16 %v295, %v293
    %v302 = vpack.c.b16 %v296, %v294
    %v303 = vpack.c.b16 %v299, %v297
    %v304 = vpack.c.b16 %v300, %v298
    %v308 = vsel %vm115, %v281, 0
    %v311 = vsel %vm115, %v282, 0
    %v314 = vsel %vm115, %v283, 0
    %v317 = vsel %vm125, %v303, 0
    %v320 = vsel %vm125, %v304, 0
    %322 = vmatpush.bf16.msra.mxu0 0
    %323 = vmatpush.bf16.msra.mxu0 0
    %324 = vmatpush.bf16.msra.mxu0 0
    %325 = vmatpush.bf16.msra.mxu0 0
    %326 = vmatpush.bf16.msra.mxu0 0
    %327 = vmatpush.bf16.msra.mxu0 0
    %328 = vmatpush.bf16.msra.mxu0 %v317
    %329 = vmatpush.bf16.msra.mxu0 %v301
    %330 = vmatmul.bf16.gmra.mxu0 %v308
    %v331 = vpop.f32.mrf.mxu0
    %v332 = vadd.f32 0.0, %v331
    %v333 = vpop.f32.mrf.mxu0
    %v334 = vadd.f32 0.0, %v333
    %335 = vmatmul.bf16.gmra.mxu0 %v311
    %v336 = vpop.f32.mrf.mxu0
    %v337 = vadd.f32 0.0, %v336
    %v338 = vpop.f32.mrf.mxu0
    %v339 = vadd.f32 0.0, %v338
    %340 = vmatmul.bf16.gmra.mxu0 %v314
    %v341 = vpop.f32.mrf.mxu0
    %v342 = vadd.f32 0.0, %v341
    %v343 = vpop.f32.mrf.mxu0
    %v344 = vadd.f32 0.0, %v343
    %345 = vdwg.mxu0
    %346 = vmatpush.bf16.msra.mxu0 0
    %347 = vmatpush.bf16.msra.mxu0 0
    %348 = vmatpush.bf16.msra.mxu0 0
    %349 = vmatpush.bf16.msra.mxu0 0
    %350 = vmatpush.bf16.msra.mxu0 0
    %351 = vmatpush.bf16.msra.mxu0 0
    %352 = vmatpush.bf16.msra.mxu0 %v320
    %353 = vmatpush.bf16.msra.mxu0 %v302
    %354 = vmatmul.bf16.gmra.mxu0 %v308
    %v355 = vpop.f32.mrf.mxu0
    %v356 = vadd.f32 0.0, %v355
    %v357 = vpop.f32.mrf.mxu0
    %v358 = vadd.f32 0.0, %v357
    %359 = vmatmul.bf16.gmra.mxu0 %v311
    %v360 = vpop.f32.mrf.mxu0
    %v361 = vadd.f32 0.0, %v360
    %v362 = vpop.f32.mrf.mxu0
    %v363 = vadd.f32 0.0, %v362
    %364 = vmatmul.bf16.gmra.mxu0 %v314
    %v365 = vpop.f32.mrf.mxu0
    %v366 = vadd.f32 0.0, %v365
    %v367 = vpop.f32.mrf.mxu0
    %v368 = vadd.f32 0.0, %v367
    %369 = vdwg.mxu0
    %v370 = vadd.f32 %v223, %v332
    %v371 = vadd.f32 %v247, %v356
    %v372 = vadd.f32 %v225, %v334
    %v373 = vadd.f32 %v249, %v358
    %v374 = vadd.f32 %v228, %v337
    %v375 = vadd.f32 %v252, %v361
    %v376 = vadd.f32 %v230, %v339
    %v377 = vadd.f32 %v254, %v363
    %v378 = vadd.f32 %v233, %v342
    %v379 = vadd.f32 %v257, %v366
    %v380 = vadd.f32 %v235, %v344
    %v381 = vadd.f32 %v259, %v368
    %vm382 = vcmask 1044480
    %v383 = vrot.slane %v45, 3
    %v384 = vrot.slane %v46, 3
    %v385 = vsel %vm382, %v383, %v384
    %v386 = vrot.slane %v47, 3
    %v387 = vsel %vm382, %v384, %v386
    %v388 = vrot.slane %v48, 3
    %v389 = vsel %vm382, %v386, %v388
    %v390 = vrot.slane %v49, 3
    %v391 = vrot.slane %v50, 3
    %v392 = vsel %vm382, %v390, %v391
    %v393 = vrot.slane %v51, 3
    %v394 = vsel %vm382, %v391, %v393
    %v395 = vrot.slane %v52, 3
    %v396 = vsel %vm382, %v393, %v395
    %v403 = vpack.c.bf16 %v387, %v385
    %v404 = vpack.c.bf16 %v392, %v389
    %v405 = vpack.c.bf16 %v396, %v394
    %s406 = scalar_lea.vmem %s1, 96
    %v407 = vld [vmem:[%s406] sm:$0xff]
    %v408 = vld [vmem:[%s406 + $0x8] sm:$0xff]
    %v409 = vld [vmem:[%s406 + $0x10] sm:$0xff]
    %v410 = vld [vmem:[%s406 + $0x18] sm:$0x33]
    %v415 = vunpack.c.l.b16 %v407
    %v416 = vunpack.c.h.b16 %v407
    %v417 = vunpack.c.l.b16 %v408
    %v418 = vunpack.c.h.b16 %v408
    %v419 = vunpack.c.l.b16 %v409
    %v420 = vunpack.c.h.b16 %v409
    %v421 = vunpack.c.l.b16 %v410
    %v422 = vunpack.c.h.b16 %v410
    %v423 = vpack.c.b16 %v417, %v415
    %v424 = vpack.c.b16 %v418, %v416
    %v425 = vpack.c.b16 %v421, %v419
    %v426 = vpack.c.b16 %v422, %v420
    %v430 = vsel %vm115, %v403, 0
    %v433 = vsel %vm115, %v404, 0
    %v436 = vsel %vm115, %v405, 0
    %v439 = vsel %vm125, %v425, 0
    %v442 = vsel %vm125, %v426, 0
    %444 = vmatpush.bf16.msra.mxu0 0
    %445 = vmatpush.bf16.msra.mxu0 0
    %446 = vmatpush.bf16.msra.mxu0 0
    %447 = vmatpush.bf16.msra.mxu0 0
    %448 = vmatpush.bf16.msra.mxu0 0
    %449 = vmatpush.bf16.msra.mxu0 0
    %450 = vmatpush.bf16.msra.mxu0 %v439
    %451 = vmatpush.bf16.msra.mxu0 %v423
    %452 = vmatmul.bf16.gmra.mxu0 %v430
    %v453 = vpop.f32.mrf.mxu0
    %v454 = vadd.f32 0.0, %v453
    %v455 = vpop.f32.mrf.mxu0
    %v456 = vadd.f32 0.0, %v455
    %457 = vmatmul.bf16.gmra.mxu0 %v433
    %v458 = vpop.f32.mrf.mxu0
    %v459 = vadd.f32 0.0, %v458
    %v460 = vpop.f32.mrf.mxu0
    %v461 = vadd.f32 0.0, %v460
    %462 = vmatmul.bf16.gmra.mxu0 %v436
    %v463 = vpop.f32.mrf.mxu0
    %v464 = vadd.f32 0.0, %v463
    %v465 = vpop.f32.mrf.mxu0
    %v466 = vadd.f32 0.0, %v465
    %467 = vdwg.mxu0
    %468 = vmatpush.bf16.msra.mxu0 0
    %469 = vmatpush.bf16.msra.mxu0 0
    %470 = vmatpush.bf16.msra.mxu0 0
    %471 = vmatpush.bf16.msra.mxu0 0
    %472 = vmatpush.bf16.msra.mxu0 0
    %473 = vmatpush.bf16.msra.mxu0 0
    %474 = vmatpush.bf16.msra.mxu0 %v442
    %475 = vmatpush.bf16.msra.mxu0 %v424
    %476 = vmatmul.bf16.gmra.mxu0 %v430
    %v477 = vpop.f32.mrf.mxu0
    %v478 = vadd.f32 0.0, %v477
    %v479 = vpop.f32.mrf.mxu0
    %v480 = vadd.f32 0.0, %v479
    %481 = vmatmul.bf16.gmra.mxu0 %v433
    %v482 = vpop.f32.mrf.mxu0
    %v483 = vadd.f32 0.0, %v482
    %v484 = vpop.f32.mrf.mxu0
    %v485 = vadd.f32 0.0, %v484
    %486 = vmatmul.bf16.gmra.mxu0 %v436
    %v487 = vpop.f32.mrf.mxu0
    %v488 = vadd.f32 0.0, %v487
    %v489 = vpop.f32.mrf.mxu0
    %v490 = vadd.f32 0.0, %v489
    %491 = vdwg.mxu0
    %v492 = vadd.f32 %v370, %v454
    %v493 = vadd.f32 %v371, %v478
    %v494 = vadd.f32 %v372, %v456
    %v495 = vadd.f32 %v373, %v480
    %v496 = vadd.f32 %v374, %v459
    %v497 = vadd.f32 %v375, %v483
    %v498 = vadd.f32 %v376, %v461
    %v499 = vadd.f32 %v377, %v485
    %v500 = vadd.f32 %v378, %v464
    %v501 = vadd.f32 %v379, %v488
    %v502 = vadd.f32 %v380, %v466
    %v503 = vadd.f32 %v381, %v490
    %vm504 = vcmask 1043456
    %v505 = vrot.slane %v45, 4
    %v506 = vrot.slane %v46, 4
    %v507 = vsel %vm504, %v505, %v506
    %v508 = vrot.slane %v47, 4
    %v509 = vsel %vm504, %v506, %v508
    %v510 = vrot.slane %v48, 4
    %v511 = vsel %vm504, %v508, %v510
    %v512 = vrot.slane %v49, 4
    %v513 = vrot.slane %v50, 4
    %v514 = vsel %vm504, %v512, %v513
    %v515 = vrot.slane %v51, 4
    %v516 = vsel %vm504, %v513, %v515
    %v517 = vrot.slane %v52, 4
    %v518 = vsel %vm504, %v515, %v517
    %v525 = vpack.c.bf16 %v509, %v507
    %v526 = vpack.c.bf16 %v514, %v511
    %v527 = vpack.c.bf16 %v518, %v516
    %s528 = scalar_lea.vmem %s1, 128
    %v529 = vld [vmem:[%s528] sm:$0xff]
    %v530 = vld [vmem:[%s528 + $0x8] sm:$0xff]
    %v531 = vld [vmem:[%s528 + $0x10] sm:$0xff]
    %v532 = vld [vmem:[%s528 + $0x18] sm:$0x33]
    %v537 = vunpack.c.l.b16 %v529
    %v538 = vunpack.c.h.b16 %v529
    %v539 = vunpack.c.l.b16 %v530
    %v540 = vunpack.c.h.b16 %v530
    %v541 = vunpack.c.l.b16 %v531
    %v542 = vunpack.c.h.b16 %v531
    %v543 = vunpack.c.l.b16 %v532
    %v544 = vunpack.c.h.b16 %v532
    %v545 = vpack.c.b16 %v539, %v537
    %v546 = vpack.c.b16 %v540, %v538
    %v547 = vpack.c.b16 %v543, %v541
    %v548 = vpack.c.b16 %v544, %v542
    %v552 = vsel %vm115, %v525, 0
    %v555 = vsel %vm115, %v526, 0
    %v558 = vsel %vm115, %v527, 0
    %v561 = vsel %vm125, %v547, 0
    %v564 = vsel %vm125, %v548, 0
    %566 = vmatpush.bf16.msra.mxu0 0
    %567 = vmatpush.bf16.msra.mxu0 0
    %568 = vmatpush.bf16.msra.mxu0 0
    %569 = vmatpush.bf16.msra.mxu0 0
    %570 = vmatpush.bf16.msra.mxu0 0
    %571 = vmatpush.bf16.msra.mxu0 0
    %572 = vmatpush.bf16.msra.mxu0 %v561
    %573 = vmatpush.bf16.msra.mxu0 %v545
    %574 = vmatmul.bf16.gmra.mxu0 %v552
    %v575 = vpop.f32.mrf.mxu0
    %v576 = vadd.f32 0.0, %v575
    %v577 = vpop.f32.mrf.mxu0
    %v578 = vadd.f32 0.0, %v577
    %579 = vmatmul.bf16.gmra.mxu0 %v555
    %v580 = vpop.f32.mrf.mxu0
    %v581 = vadd.f32 0.0, %v580
    %v582 = vpop.f32.mrf.mxu0
    %v583 = vadd.f32 0.0, %v582
    %584 = vmatmul.bf16.gmra.mxu0 %v558
    %v585 = vpop.f32.mrf.mxu0
    %v586 = vadd.f32 0.0, %v585
    %v587 = vpop.f32.mrf.mxu0
    %v588 = vadd.f32 0.0, %v587
    %589 = vdwg.mxu0
    %590 = vmatpush.bf16.msra.mxu0 0
    %591 = vmatpush.bf16.msra.mxu0 0
    %592 = vmatpush.bf16.msra.mxu0 0
    %593 = vmatpush.bf16.msra.mxu0 0
    %594 = vmatpush.bf16.msra.mxu0 0
    %595 = vmatpush.bf16.msra.mxu0 0
    %596 = vmatpush.bf16.msra.mxu0 %v564
    %597 = vmatpush.bf16.msra.mxu0 %v546
    %598 = vmatmul.bf16.gmra.mxu0 %v552
    %v599 = vpop.f32.mrf.mxu0
    %v600 = vadd.f32 0.0, %v599
    %v601 = vpop.f32.mrf.mxu0
    %v602 = vadd.f32 0.0, %v601
    %603 = vmatmul.bf16.gmra.mxu0 %v555
    %v604 = vpop.f32.mrf.mxu0
    %v605 = vadd.f32 0.0, %v604
    %v606 = vpop.f32.mrf.mxu0
    %v607 = vadd.f32 0.0, %v606
    %608 = vmatmul.bf16.gmra.mxu0 %v558
    %v609 = vpop.f32.mrf.mxu0
    %v610 = vadd.f32 0.0, %v609
    %v611 = vpop.f32.mrf.mxu0
    %v612 = vadd.f32 0.0, %v611
    %613 = vdwg.mxu0
    %v614 = vadd.f32 %v492, %v576
    %v615 = vadd.f32 %v493, %v600
    %v616 = vadd.f32 %v494, %v578
    %v617 = vadd.f32 %v495, %v602
    %v618 = vadd.f32 %v496, %v581
    %v619 = vadd.f32 %v497, %v605
    %v620 = vadd.f32 %v498, %v583
    %v621 = vadd.f32 %v499, %v607
    %v622 = vadd.f32 %v500, %v586
    %v623 = vadd.f32 %v501, %v610
    %v624 = vadd.f32 %v502, %v588
    %v625 = vadd.f32 %v503, %v612
    %v626 = vld [vmem:[%s2] sm:$0x3]
    %v628 = vperm.slane %v626, 0
    %v629 = vperm.slane %v626, 1
    %v632 = vadd.f32 %v614, %v628
    %v633 = vadd.f32 %v615, %v629
    %v634 = vadd.f32 %v616, %v628
    %v635 = vadd.f32 %v617, %v629
    %v636 = vadd.f32 %v618, %v628
    %v637 = vadd.f32 %v619, %v629
    %v638 = vadd.f32 %v620, %v628
    %v639 = vadd.f32 %v621, %v629
    %v640 = vadd.f32 %v622, %v628
    %v641 = vadd.f32 %v623, %v629
    %v642 = vadd.f32 %v624, %v628
    %v643 = vadd.f32 %v625, %v629
    %v644 = vmax.f32 %v632, 0.0
    %v645 = vmax.f32 %v633, 0.0
    %v646 = vmax.f32 %v634, 0.0
    %v647 = vmax.f32 %v635, 0.0
    %v648 = vmax.f32 %v636, 0.0
    %v649 = vmax.f32 %v637, 0.0
    %v650 = vmax.f32 %v638, 0.0
    %v651 = vmax.f32 %v639, 0.0
    %v652 = vmax.f32 %v640, 0.0
    %v653 = vmax.f32 %v641, 0.0
    %v654 = vmax.f32 %v642, 0.0
    %v655 = vmax.f32 %v643, 0.0
    %v656 = vmax.f32 %v644, %v645
    %v657 = vmax.f32 %v646, %v647
    %v658 = vmax.f32 %v648, %v649
    %v659 = vmax.f32 %v650, %v651
    %v660 = vmax.f32 %v652, %v653
    %v661 = vmax.f32 %v654, %v655
    %v668 = vrot.slane %v656, 2
    %v669 = vrot.slane %v656, 4
    %v670 = vrot.slane %v656, 6
    %v671 = vrot.slane %v657, 2
    %v672 = vrot.slane %v657, 4
    %v673 = vrot.slane %v657, 6
    %v674 = vrot.slane %v658, 2
    %v675 = vrot.slane %v658, 4
    %v676 = vrot.slane %v658, 6
    %v677 = vrot.slane %v659, 2
    %v678 = vrot.slane %v659, 4
    %v679 = vrot.slane %v659, 6
    %v680 = vrot.slane %v660, 2
    %v681 = vrot.slane %v660, 4
    %v682 = vrot.slane %v660, 6
    %v683 = vrot.slane %v661, 2
    %v684 = vrot.slane %v661, 4
    %v685 = vrot.slane %v661, 6
    %v704 = vrot.slane %v656, 7
    %v705 = vrot.slane %v704, 2
    %v706 = vrot.slane %v668, 7
    %v707 = vrot.slane %v706, 2
    %v708 = vrot.slane %v669, 7
    %v709 = vrot.slane %v708, 2
    %v710 = vrot.slane %v670, 7
    %v711 = vrot.slane %v710, 2
    %v712 = vrot.slane %v657, 7
    %v713 = vrot.slane %v712, 2
    %v714 = vrot.slane %v671, 7
    %v715 = vrot.slane %v714, 2
    %v716 = vrot.slane %v672, 7
    %v717 = vrot.slane %v716, 2
    %v718 = vrot.slane %v673, 7
    %v719 = vrot.slane %v718, 2
    %v720 = vrot.slane %v658, 7
    %v721 = vrot.slane %v720, 2
    %v722 = vrot.slane %v674, 7
    %v723 = vrot.slane %v722, 2
    %v724 = vrot.slane %v675, 7
    %v725 = vrot.slane %v724, 2
    %v726 = vrot.slane %v676, 7
    %v727 = vrot.slane %v726, 2
    %v728 = vrot.slane %v659, 7
    %v729 = vrot.slane %v728, 2
    %v730 = vrot.slane %v677, 7
    %v731 = vrot.slane %v730, 2
    %v732 = vrot.slane %v678, 7
    %v733 = vrot.slane %v732, 2
    %v734 = vrot.slane %v679, 7
    %v735 = vrot.slane %v734, 2
    %v736 = vrot.slane %v660, 7
    %v737 = vrot.slane %v736, 2
    %v738 = vrot.slane %v680, 7
    %v739 = vrot.slane %v738, 2
    %v740 = vrot.slane %v681, 7
    %v741 = vrot.slane %v740, 2
    %v742 = vrot.slane %v682, 7
    %v743 = vrot.slane %v742, 2
    %v744 = vrot.slane %v661, 7
    %v745 = vrot.slane %v744, 2
    %v746 = vrot.slane %v683, 7
    %v747 = vrot.slane %v746, 2
    %v748 = vrot.slane %v684, 7
    %v749 = vrot.slane %v748, 2
    %v750 = vrot.slane %v685, 7
    %v751 = vrot.slane %v750, 2
    %v776 = vmax.f32 %v656, %v705
    %v777 = vmax.f32 %v668, %v707
    %v778 = vmax.f32 %v669, %v709
    %v779 = vmax.f32 %v670, %v711
    %v780 = vmax.f32 %v657, %v713
    %v781 = vmax.f32 %v671, %v715
    %v782 = vmax.f32 %v672, %v717
    %v783 = vmax.f32 %v673, %v719
    %v784 = vmax.f32 %v658, %v721
    %v785 = vmax.f32 %v674, %v723
    %v786 = vmax.f32 %v675, %v725
    %v787 = vmax.f32 %v676, %v727
    %v788 = vmax.f32 %v659, %v729
    %v789 = vmax.f32 %v677, %v731
    %v790 = vmax.f32 %v678, %v733
    %v791 = vmax.f32 %v679, %v735
    %v792 = vmax.f32 %v660, %v737
    %v793 = vmax.f32 %v680, %v739
    %v794 = vmax.f32 %v681, %v741
    %v795 = vmax.f32 %v682, %v743
    %v796 = vmax.f32 %v661, %v745
    %v797 = vmax.f32 %v683, %v747
    %v798 = vmax.f32 %v684, %v749
    %v799 = vmax.f32 %v685, %v751
    %v800 = vpack.c.bf16 %v776, %v776
    %v801 = vpack.c.bf16 %v777, %v777
    %v802 = vpack.c.bf16 %v778, %v778
    %v803 = vpack.c.bf16 %v779, %v779
    %v804 = vpack.c.bf16 %v780, %v780
    %v805 = vpack.c.bf16 %v781, %v781
    %v806 = vpack.c.bf16 %v782, %v782
    %v807 = vpack.c.bf16 %v783, %v783
    %v808 = vpack.c.bf16 %v788, %v788
    %v809 = vpack.c.bf16 %v789, %v789
    %v810 = vpack.c.bf16 %v790, %v790
    %v811 = vpack.c.bf16 %v791, %v791
    %v812 = vpack.c.bf16 %v792, %v792
    %v813 = vpack.c.bf16 %v793, %v793
    %v814 = vpack.c.bf16 %v794, %v794
    %v815 = vpack.c.bf16 %v795, %v795
    %v816 = vld [vmem:[%s3] sm:$0xff]
    %v817 = vld [vmem:[%s3 + $0x8] sm:$0xff]
    %v818 = vld [vmem:[%s3 + $0x10] sm:$0xff]
    %v819 = vld [vmem:[%s3 + $0x18] sm:$0xff]
    %v820 = vld [vmem:[%s3 + $0x20] sm:$0xff]
    %v821 = vld [vmem:[%s3 + $0x28] sm:$0xff]
    %v822 = vld [vmem:[%s3 + $0x30] sm:$0xff]
    %v823 = vld [vmem:[%s3 + $0x38] sm:$0xff]
    %v824 = vld [vmem:[%s3 + $0x40] sm:$0xff]
    %v825 = vld [vmem:[%s3 + $0x48] sm:$0xff]
    %v826 = vld [vmem:[%s3 + $0x50] sm:$0xff]
    %v827 = vld [vmem:[%s3 + $0x58] sm:$0xff]
    %v828 = vld [vmem:[%s3 + $0x60] sm:$0xff]
    %v829 = vld [vmem:[%s3 + $0x68] sm:$0xff]
    %v830 = vld [vmem:[%s3 + $0x70] sm:$0xff]
    %v831 = vld [vmem:[%s3 + $0x78] sm:$0xff]
    %v832 = vpack.c.bf16 %v784, %v784
    %v833 = vpack.c.bf16 %v796, %v796
    %s834 = scalar_lea.vmem %s3, 128
    %v835 = vld [vmem:[%s834] sm:$0xff]
    %v836 = vld [vmem:[%s834 + $0x8] sm:$0xff]
    %v837 = vld [vmem:[%s834 + $0x10] sm:$0xff]
    %v838 = vld [vmem:[%s834 + $0x18] sm:$0xff]
    %v839 = vld [vmem:[%s834 + $0x20] sm:$0xff]
    %v840 = vld [vmem:[%s834 + $0x28] sm:$0xff]
    %v841 = vld [vmem:[%s834 + $0x30] sm:$0xff]
    %v842 = vld [vmem:[%s834 + $0x38] sm:$0xff]
    %v843 = vld [vmem:[%s834 + $0x40] sm:$0xff]
    %v844 = vld [vmem:[%s834 + $0x48] sm:$0xff]
    %v845 = vld [vmem:[%s834 + $0x50] sm:$0xff]
    %v846 = vld [vmem:[%s834 + $0x58] sm:$0xff]
    %v847 = vld [vmem:[%s834 + $0x60] sm:$0xff]
    %v848 = vld [vmem:[%s834 + $0x68] sm:$0xff]
    %v849 = vld [vmem:[%s834 + $0x70] sm:$0xff]
    %v850 = vld [vmem:[%s834 + $0x78] sm:$0xff]
    %v867 = vunpack.c.l.b16 %v801
    %v868 = vunpack.c.l.b16 %v802
    %v869 = vunpack.c.l.b16 %v803
    %v870 = vunpack.c.l.b16 %v804
    %v871 = vunpack.c.l.b16 %v805
    %v872 = vunpack.c.l.b16 %v806
    %v873 = vunpack.c.l.b16 %v807
    %v874 = vunpack.c.l.b16 %v832
    %v875 = vunpack.c.l.b16 %v809
    %v876 = vunpack.c.l.b16 %v810
    %v877 = vunpack.c.l.b16 %v811
    %v878 = vunpack.c.l.b16 %v812
    %v879 = vunpack.c.l.b16 %v813
    %v880 = vunpack.c.l.b16 %v814
    %v881 = vunpack.c.l.b16 %v815
    %v882 = vunpack.c.l.b16 %v833
    %v883 = vrot.slane %v868, 7
    %vm884 = vcmask 1041409
    %v885 = vsel %vm884, %v883, %v867
    %v886 = vrot.slane %v869, 6
    %vm887 = vcmask 1042434
    %v888 = vsel %vm887, %v886, %v885
    %v889 = vrot.slane %v870, 5
    %vm890 = vcmask 1043459
    %v891 = vsel %vm890, %v889, %v888
    %v892 = vrot.slane %v871, 4
    %vm893 = vcmask 1044484
    %v894 = vsel %vm893, %v892, %v891
    %v895 = vrot.slane %v872, 3
    %vm896 = vcmask 1045509
    %v897 = vsel %vm896, %v895, %v894
    %v898 = vrot.slane %v873, 2
    %vm899 = vcmask 1046534
    %v900 = vsel %vm899, %v898, %v897
    %v901 = vrot.slane %v874, 1
    %vm902 = vcmask 1047559
    %v903 = vsel %vm902, %v901, %v900
    %v904 = vrot.slane %v876, 7
    %v905 = vsel %vm884, %v904, %v875
    %v906 = vrot.slane %v877, 6
    %v907 = vsel %vm887, %v906, %v905
    %v908 = vrot.slane %v878, 5
    %v909 = vsel %vm890, %v908, %v907
    %v910 = vrot.slane %v879, 4
    %v911 = vsel %vm893, %v910, %v909
    %v912 = vrot.slane %v880, 3
    %v913 = vsel %vm896, %v912, %v911
    %v914 = vrot.slane %v881, 2
    %v915 = vsel %vm899, %v914, %v913
    %v916 = vrot.slane %v882, 1
    %v917 = vsel %vm902, %v916, %v915
    %v918 = vpack.c.b16 %v917, %v903
    %v936 = vunpack.c.l.b16 %v835
    %v937 = vunpack.c.h.b16 %v835
    %v938 = vunpack.c.l.b16 %v836
    %v939 = vunpack.c.h.b16 %v836
    %v940 = vunpack.c.l.b16 %v837
    %v941 = vunpack.c.h.b16 %v837
    %v942 = vunpack.c.l.b16 %v838
    %v943 = vunpack.c.h.b16 %v838
    %v944 = vunpack.c.l.b16 %v839
    %v945 = vunpack.c.h.b16 %v839
    %v946 = vunpack.c.l.b16 %v840
    %v947 = vunpack.c.h.b16 %v840
    %v948 = vunpack.c.l.b16 %v841
    %v949 = vunpack.c.h.b16 %v841
    %v950 = vunpack.c.l.b16 %v842
    %v951 = vunpack.c.h.b16 %v842
    %v952 = vunpack.c.l.b16 %v843
    %v953 = vunpack.c.h.b16 %v843
    %v954 = vunpack.c.l.b16 %v844
    %v955 = vunpack.c.h.b16 %v844
    %v956 = vunpack.c.l.b16 %v845
    %v957 = vunpack.c.h.b16 %v845
    %v958 = vunpack.c.l.b16 %v846
    %v959 = vunpack.c.h.b16 %v846
    %v960 = vunpack.c.l.b16 %v847
    %v961 = vunpack.c.h.b16 %v847
    %v962 = vunpack.c.l.b16 %v848
    %v963 = vunpack.c.h.b16 %v848
    %v964 = vunpack.c.l.b16 %v849
    %v965 = vunpack.c.h.b16 %v849
    %v966 = vunpack.c.l.b16 %v850
    %v967 = vunpack.c.h.b16 %v850
    %v968 = vpack.c.b16 %v938, %v936
    %v969 = vpack.c.b16 %v939, %v937
    %v970 = vpack.c.b16 %v942, %v940
    %v971 = vpack.c.b16 %v943, %v941
    %v972 = vpack.c.b16 %v946, %v944
    %v973 = vpack.c.b16 %v947, %v945
    %v974 = vpack.c.b16 %v950, %v948
    %v975 = vpack.c.b16 %v951, %v949
    %v976 = vpack.c.b16 %v954, %v952
    %v977 = vpack.c.b16 %v955, %v953
    %v978 = vpack.c.b16 %v958, %v956
    %v979 = vpack.c.b16 %v959, %v957
    %v980 = vpack.c.b16 %v962, %v960
    %v981 = vpack.c.b16 %v963, %v961
    %v982 = vpack.c.b16 %v966, %v964
    %v983 = vpack.c.b16 %v967, %v965
    %1000 = vmatpush.bf16.msra.mxu0 %v982
    %1001 = vmatpush.bf16.msra.mxu0 %v980
    %1002 = vmatpush.bf16.msra.mxu0 %v978
    %1003 = vmatpush.bf16.msra.mxu0 %v976
    %1004 = vmatpush.bf16.msra.mxu0 %v974
    %1005 = vmatpush.bf16.msra.mxu0 %v972
    %1006 = vmatpush.bf16.msra.mxu0 %v970
    %1007 = vmatpush.bf16.msra.mxu0 %v968
    %1008 = vmatmul.bf16.gmra.mxu0 %v918
    %v1009 = vpop.f32.mrf.mxu0
    %v1010 = vadd.f32 0.0, %v1009
    %v1011 = vpop.f32.mrf.mxu0
    %v1012 = vadd.f32 0.0, %v1011
    %1013 = vdwg.mxu0
    %1014 = vmatpush.bf16.msra.mxu0 %v983
    %1015 = vmatpush.bf16.msra.mxu0 %v981
    %1016 = vmatpush.bf16.msra.mxu0 %v979
    %1017 = vmatpush.bf16.msra.mxu0 %v977
    %1018 = vmatpush.bf16.msra.mxu0 %v975
    %1019 = vmatpush.bf16.msra.mxu0 %v973
    %1020 = vmatpush.bf16.msra.mxu0 %v971
    %1021 = vmatpush.bf16.msra.mxu0 %v969
    %1022 = vmatmul.bf16.gmra.mxu0 %v918
    %v1023 = vpop.f32.mrf.mxu0
    %v1024 = vadd.f32 0.0, %v1023
    %v1025 = vpop.f32.mrf.mxu0
    %v1026 = vadd.f32 0.0, %v1025
    %1027 = vdwg.mxu0
    %v1030 = vunpack.c.l.b16 %v800
    %v1031 = vunpack.c.l.b16 %v808
    %v1032 = vrot.slane %v867, 7
    %v1033 = vsel %vm884, %v1032, %v1030
    %v1034 = vrot.slane %v868, 6
    %v1035 = vsel %vm887, %v1034, %v1033
    %v1036 = vrot.slane %v869, 5
    %v1037 = vsel %vm890, %v1036, %v1035
    %v1038 = vrot.slane %v870, 4
    %v1039 = vsel %vm893, %v1038, %v1037
    %v1040 = vrot.slane %v871, 3
    %v1041 = vsel %vm896, %v1040, %v1039
    %v1042 = vrot.slane %v872, 2
    %v1043 = vsel %vm899, %v1042, %v1041
    %v1044 = vrot.slane %v873, 1
    %v1045 = vsel %vm902, %v1044, %v1043
    %v1046 = vrot.slane %v875, 7
    %v1047 = vsel %vm884, %v1046, %v1031
    %v1048 = vrot.slane %v876, 6
    %v1049 = vsel %vm887, %v1048, %v1047
    %v1050 = vrot.slane %v877, 5
    %v1051 = vsel %vm890, %v1050, %v1049
    %v1052 = vrot.slane %v878, 4
    %v1053 = vsel %vm893, %v1052, %v1051
    %v1054 = vrot.slane %v879, 3
    %v1055 = vsel %vm896, %v1054, %v1053
    %v1056 = vrot.slane %v880, 2
    %v1057 = vsel %vm899, %v1056, %v1055
    %v1058 = vrot.slane %v881, 1
    %v1059 = vsel %vm902, %v1058, %v1057
    %v1060 = vpack.c.b16 %v1059, %v1045
    %v1078 = vunpack.c.l.b16 %v816
    %v1079 = vunpack.c.h.b16 %v816
    %v1080 = vunpack.c.l.b16 %v817
    %v1081 = vunpack.c.h.b16 %v817
    %v1082 = vunpack.c.l.b16 %v818
    %v1083 = vunpack.c.h.b16 %v818
    %v1084 = vunpack.c.l.b16 %v819
    %v1085 = vunpack.c.h.b16 %v819
    %v1086 = vunpack.c.l.b16 %v820
    %v1087 = vunpack.c.h.b16 %v820
    %v1088 = vunpack.c.l.b16 %v821
    %v1089 = vunpack.c.h.b16 %v821
    %v1090 = vunpack.c.l.b16 %v822
    %v1091 = vunpack.c.h.b16 %v822
    %v1092 = vunpack.c.l.b16 %v823
    %v1093 = vunpack.c.h.b16 %v823
    %v1094 = vunpack.c.l.b16 %v824
    %v1095 = vunpack.c.h.b16 %v824
    %v1096 = vunpack.c.l.b16 %v825
    %v1097 = vunpack.c.h.b16 %v825
    %v1098 = vunpack.c.l.b16 %v826
    %v1099 = vunpack.c.h.b16 %v826
    %v1100 = vunpack.c.l.b16 %v827
    %v1101 = vunpack.c.h.b16 %v827
    %v1102 = vunpack.c.l.b16 %v828
    %v1103 = vunpack.c.h.b16 %v828
    %v1104 = vunpack.c.l.b16 %v829
    %v1105 = vunpack.c.h.b16 %v829
    %v1106 = vunpack.c.l.b16 %v830
    %v1107 = vunpack.c.h.b16 %v830
    %v1108 = vunpack.c.l.b16 %v831
    %v1109 = vunpack.c.h.b16 %v831
    %v1110 = vpack.c.b16 %v1080, %v1078
    %v1111 = vpack.c.b16 %v1081, %v1079
    %v1112 = vpack.c.b16 %v1084, %v1082
    %v1113 = vpack.c.b16 %v1085, %v1083
    %v1114 = vpack.c.b16 %v1088, %v1086
    %v1115 = vpack.c.b16 %v1089, %v1087
    %v1116 = vpack.c.b16 %v1092, %v1090
    %v1117 = vpack.c.b16 %v1093, %v1091
    %v1118 = vpack.c.b16 %v1096, %v1094
    %v1119 = vpack.c.b16 %v1097, %v1095
    %v1120 = vpack.c.b16 %v1100, %v1098
    %v1121 = vpack.c.b16 %v1101, %v1099
    %v1122 = vpack.c.b16 %v1104, %v1102
    %v1123 = vpack.c.b16 %v1105, %v1103
    %v1124 = vpack.c.b16 %v1108, %v1106
    %v1125 = vpack.c.b16 %v1109, %v1107
    %1142 = vmatpush.bf16.msra.mxu0 %v1124
    %1143 = vmatpush.bf16.msra.mxu0 %v1122
    %1144 = vmatpush.bf16.msra.mxu0 %v1120
    %1145 = vmatpush.bf16.msra.mxu0 %v1118
    %1146 = vmatpush.bf16.msra.mxu0 %v1116
    %1147 = vmatpush.bf16.msra.mxu0 %v1114
    %1148 = vmatpush.bf16.msra.mxu0 %v1112
    %1149 = vmatpush.bf16.msra.mxu0 %v1110
    %1150 = vmatmul.bf16.gmra.mxu0 %v1060
    %v1151 = vpop.f32.mrf.mxu0
    %v1152 = vadd.f32 %v1010, %v1151
    %v1153 = vpop.f32.mrf.mxu0
    %v1154 = vadd.f32 %v1012, %v1153
    %1155 = vdwg.mxu0
    %1156 = vmatpush.bf16.msra.mxu0 %v1125
    %1157 = vmatpush.bf16.msra.mxu0 %v1123
    %1158 = vmatpush.bf16.msra.mxu0 %v1121
    %1159 = vmatpush.bf16.msra.mxu0 %v1119
    %1160 = vmatpush.bf16.msra.mxu0 %v1117
    %1161 = vmatpush.bf16.msra.mxu0 %v1115
    %1162 = vmatpush.bf16.msra.mxu0 %v1113
    %1163 = vmatpush.bf16.msra.mxu0 %v1111
    %1164 = vmatmul.bf16.gmra.mxu0 %v1060
    %v1165 = vpop.f32.mrf.mxu0
    %v1166 = vadd.f32 %v1024, %v1165
    %v1167 = vpop.f32.mrf.mxu0
    %v1168 = vadd.f32 %v1026, %v1167
    %1169 = vdwg.mxu0
    %v1170 = vpack.c.bf16 %v785, %v785
    %v1171 = vpack.c.bf16 %v797, %v797
    %s1172 = scalar_lea.vmem %s3, 256
    %v1173 = vld [vmem:[%s1172] sm:$0xff]
    %v1174 = vld [vmem:[%s1172 + $0x8] sm:$0xff]
    %v1175 = vld [vmem:[%s1172 + $0x10] sm:$0xff]
    %v1176 = vld [vmem:[%s1172 + $0x18] sm:$0xff]
    %v1177 = vld [vmem:[%s1172 + $0x20] sm:$0xff]
    %v1178 = vld [vmem:[%s1172 + $0x28] sm:$0xff]
    %v1179 = vld [vmem:[%s1172 + $0x30] sm:$0xff]
    %v1180 = vld [vmem:[%s1172 + $0x38] sm:$0xff]
    %v1181 = vld [vmem:[%s1172 + $0x40] sm:$0xff]
    %v1182 = vld [vmem:[%s1172 + $0x48] sm:$0xff]
    %v1183 = vld [vmem:[%s1172 + $0x50] sm:$0xff]
    %v1184 = vld [vmem:[%s1172 + $0x58] sm:$0xff]
    %v1185 = vld [vmem:[%s1172 + $0x60] sm:$0xff]
    %v1186 = vld [vmem:[%s1172 + $0x68] sm:$0xff]
    %v1187 = vld [vmem:[%s1172 + $0x70] sm:$0xff]
    %v1188 = vld [vmem:[%s1172 + $0x78] sm:$0xff]
    %v1191 = vunpack.c.l.b16 %v1170
    %v1192 = vunpack.c.l.b16 %v1171
    %v1193 = vrot.slane %v869, 7
    %v1194 = vsel %vm884, %v1193, %v868
    %v1195 = vrot.slane %v870, 6
    %v1196 = vsel %vm887, %v1195, %v1194
    %v1197 = vrot.slane %v871, 5
    %v1198 = vsel %vm890, %v1197, %v1196
    %v1199 = vrot.slane %v872, 4
    %v1200 = vsel %vm893, %v1199, %v1198
    %v1201 = vrot.slane %v873, 3
    %v1202 = vsel %vm896, %v1201, %v1200
    %v1203 = vrot.slane %v874, 2
    %v1204 = vsel %vm899, %v1203, %v1202
    %v1205 = vrot.slane %v1191, 1
    %v1206 = vsel %vm902, %v1205, %v1204
    %v1207 = vrot.slane %v877, 7
    %v1208 = vsel %vm884, %v1207, %v876
    %v1209 = vrot.slane %v878, 6
    %v1210 = vsel %vm887, %v1209, %v1208
    %v1211 = vrot.slane %v879, 5
    %v1212 = vsel %vm890, %v1211, %v1210
    %v1213 = vrot.slane %v880, 4
    %v1214 = vsel %vm893, %v1213, %v1212
    %v1215 = vrot.slane %v881, 3
    %v1216 = vsel %vm896, %v1215, %v1214
    %v1217 = vrot.slane %v882, 2
    %v1218 = vsel %vm899, %v1217, %v1216
    %v1219 = vrot.slane %v1192, 1
    %v1220 = vsel %vm902, %v1219, %v1218
    %v1221 = vpack.c.b16 %v1220, %v1206
    %v1239 = vunpack.c.l.b16 %v1173
    %v1240 = vunpack.c.h.b16 %v1173
    %v1241 = vunpack.c.l.b16 %v1174
    %v1242 = vunpack.c.h.b16 %v1174
    %v1243 = vunpack.c.l.b16 %v1175
    %v1244 = vunpack.c.h.b16 %v1175
    %v1245 = vunpack.c.l.b16 %v1176
    %v1246 = vunpack.c.h.b16 %v1176
    %v1247 = vunpack.c.l.b16 %v1177
    %v1248 = vunpack.c.h.b16 %v1177
    %v1249 = vunpack.c.l.b16 %v1178
    %v1250 = vunpack.c.h.b16 %v1178
    %v1251 = vunpack.c.l.b16 %v1179
    %v1252 = vunpack.c.h.b16 %v1179
    %v1253 = vunpack.c.l.b16 %v1180
    %v1254 = vunpack.c.h.b16 %v1180
    %v1255 = vunpack.c.l.b16 %v1181
    %v1256 = vunpack.c.h.b16 %v1181
    %v1257 = vunpack.c.l.b16 %v1182
    %v1258 = vunpack.c.h.b16 %v1182
    %v1259 = vunpack.c.l.b16 %v1183
    %v1260 = vunpack.c.h.b16 %v1183
    %v1261 = vunpack.c.l.b16 %v1184
    %v1262 = vunpack.c.h.b16 %v1184
    %v1263 = vunpack.c.l.b16 %v1185
    %v1264 = vunpack.c.h.b16 %v1185
    %v1265 = vunpack.c.l.b16 %v1186
    %v1266 = vunpack.c.h.b16 %v1186
    %v1267 = vunpack.c.l.b16 %v1187
    %v1268 = vunpack.c.h.b16 %v1187
    %v1269 = vunpack.c.l.b16 %v1188
    %v1270 = vunpack.c.h.b16 %v1188
    %v1271 = vpack.c.b16 %v1241, %v1239
    %v1272 = vpack.c.b16 %v1242, %v1240
    %v1273 = vpack.c.b16 %v1245, %v1243
    %v1274 = vpack.c.b16 %v1246, %v1244
    %v1275 = vpack.c.b16 %v1249, %v1247
    %v1276 = vpack.c.b16 %v1250, %v1248
    %v1277 = vpack.c.b16 %v1253, %v1251
    %v1278 = vpack.c.b16 %v1254, %v1252
    %v1279 = vpack.c.b16 %v1257, %v1255
    %v1280 = vpack.c.b16 %v1258, %v1256
    %v1281 = vpack.c.b16 %v1261, %v1259
    %v1282 = vpack.c.b16 %v1262, %v1260
    %v1283 = vpack.c.b16 %v1265, %v1263
    %v1284 = vpack.c.b16 %v1266, %v1264
    %v1285 = vpack.c.b16 %v1269, %v1267
    %v1286 = vpack.c.b16 %v1270, %v1268
    %1303 = vmatpush.bf16.msra.mxu0 %v1285
    %1304 = vmatpush.bf16.msra.mxu0 %v1283
    %1305 = vmatpush.bf16.msra.mxu0 %v1281
    %1306 = vmatpush.bf16.msra.mxu0 %v1279
    %1307 = vmatpush.bf16.msra.mxu0 %v1277
    %1308 = vmatpush.bf16.msra.mxu0 %v1275
    %1309 = vmatpush.bf16.msra.mxu0 %v1273
    %1310 = vmatpush.bf16.msra.mxu0 %v1271
    %1311 = vmatmul.bf16.gmra.mxu0 %v1221
    %v1312 = vpop.f32.mrf.mxu0
    %v1313 = vadd.f32 0.0, %v1312
    %v1314 = vpop.f32.mrf.mxu0
    %v1315 = vadd.f32 0.0, %v1314
    %1316 = vdwg.mxu0
    %1317 = vmatpush.bf16.msra.mxu0 %v1286
    %1318 = vmatpush.bf16.msra.mxu0 %v1284
    %1319 = vmatpush.bf16.msra.mxu0 %v1282
    %1320 = vmatpush.bf16.msra.mxu0 %v1280
    %1321 = vmatpush.bf16.msra.mxu0 %v1278
    %1322 = vmatpush.bf16.msra.mxu0 %v1276
    %1323 = vmatpush.bf16.msra.mxu0 %v1274
    %1324 = vmatpush.bf16.msra.mxu0 %v1272
    %1325 = vmatmul.bf16.gmra.mxu0 %v1221
    %v1326 = vpop.f32.mrf.mxu0
    %v1327 = vadd.f32 0.0, %v1326
    %v1328 = vpop.f32.mrf.mxu0
    %v1329 = vadd.f32 0.0, %v1328
    %1330 = vdwg.mxu0
    %v1331 = vadd.f32 %v1152, %v1313
    %v1332 = vadd.f32 %v1166, %v1327
    %v1333 = vadd.f32 %v1154, %v1315
    %v1334 = vadd.f32 %v1168, %v1329
    %v1335 = vpack.c.bf16 %v786, %v786
    %v1336 = vpack.c.bf16 %v798, %v798
    %s1337 = scalar_lea.vmem %s3, 384
    %v1338 = vld [vmem:[%s1337] sm:$0xff]
    %v1339 = vld [vmem:[%s1337 + $0x8] sm:$0xff]
    %v1340 = vld [vmem:[%s1337 + $0x10] sm:$0xff]
    %v1341 = vld [vmem:[%s1337 + $0x18] sm:$0xff]
    %v1342 = vld [vmem:[%s1337 + $0x20] sm:$0xff]
    %v1343 = vld [vmem:[%s1337 + $0x28] sm:$0xff]
    %v1344 = vld [vmem:[%s1337 + $0x30] sm:$0xff]
    %v1345 = vld [vmem:[%s1337 + $0x38] sm:$0xff]
    %v1346 = vld [vmem:[%s1337 + $0x40] sm:$0xff]
    %v1347 = vld [vmem:[%s1337 + $0x48] sm:$0xff]
    %v1348 = vld [vmem:[%s1337 + $0x50] sm:$0xff]
    %v1349 = vld [vmem:[%s1337 + $0x58] sm:$0xff]
    %v1350 = vld [vmem:[%s1337 + $0x60] sm:$0xff]
    %v1351 = vld [vmem:[%s1337 + $0x68] sm:$0xff]
    %v1352 = vld [vmem:[%s1337 + $0x70] sm:$0xff]
    %v1353 = vld [vmem:[%s1337 + $0x78] sm:$0xff]
    %v1356 = vunpack.c.l.b16 %v1335
    %v1357 = vunpack.c.l.b16 %v1336
    %v1358 = vrot.slane %v870, 7
    %v1359 = vsel %vm884, %v1358, %v869
    %v1360 = vrot.slane %v871, 6
    %v1361 = vsel %vm887, %v1360, %v1359
    %v1362 = vrot.slane %v872, 5
    %v1363 = vsel %vm890, %v1362, %v1361
    %v1364 = vrot.slane %v873, 4
    %v1365 = vsel %vm893, %v1364, %v1363
    %v1366 = vrot.slane %v874, 3
    %v1367 = vsel %vm896, %v1366, %v1365
    %v1368 = vrot.slane %v1191, 2
    %v1369 = vsel %vm899, %v1368, %v1367
    %v1370 = vrot.slane %v1356, 1
    %v1371 = vsel %vm902, %v1370, %v1369
    %v1372 = vrot.slane %v878, 7
    %v1373 = vsel %vm884, %v1372, %v877
    %v1374 = vrot.slane %v879, 6
    %v1375 = vsel %vm887, %v1374, %v1373
    %v1376 = vrot.slane %v880, 5
    %v1377 = vsel %vm890, %v1376, %v1375
    %v1378 = vrot.slane %v881, 4
    %v1379 = vsel %vm893, %v1378, %v1377
    %v1380 = vrot.slane %v882, 3
    %v1381 = vsel %vm896, %v1380, %v1379
    %v1382 = vrot.slane %v1192, 2
    %v1383 = vsel %vm899, %v1382, %v1381
    %v1384 = vrot.slane %v1357, 1
    %v1385 = vsel %vm902, %v1384, %v1383
    %v1386 = vpack.c.b16 %v1385, %v1371
    %v1404 = vunpack.c.l.b16 %v1338
    %v1405 = vunpack.c.h.b16 %v1338
    %v1406 = vunpack.c.l.b16 %v1339
    %v1407 = vunpack.c.h.b16 %v1339
    %v1408 = vunpack.c.l.b16 %v1340
    %v1409 = vunpack.c.h.b16 %v1340
    %v1410 = vunpack.c.l.b16 %v1341
    %v1411 = vunpack.c.h.b16 %v1341
    %v1412 = vunpack.c.l.b16 %v1342
    %v1413 = vunpack.c.h.b16 %v1342
    %v1414 = vunpack.c.l.b16 %v1343
    %v1415 = vunpack.c.h.b16 %v1343
    %v1416 = vunpack.c.l.b16 %v1344
    %v1417 = vunpack.c.h.b16 %v1344
    %v1418 = vunpack.c.l.b16 %v1345
    %v1419 = vunpack.c.h.b16 %v1345
    %v1420 = vunpack.c.l.b16 %v1346
    %v1421 = vunpack.c.h.b16 %v1346
    %v1422 = vunpack.c.l.b16 %v1347
    %v1423 = vunpack.c.h.b16 %v1347
    %v1424 = vunpack.c.l.b16 %v1348
    %v1425 = vunpack.c.h.b16 %v1348
    %v1426 = vunpack.c.l.b16 %v1349
    %v1427 = vunpack.c.h.b16 %v1349
    %v1428 = vunpack.c.l.b16 %v1350
    %v1429 = vunpack.c.h.b16 %v1350
    %v1430 = vunpack.c.l.b16 %v1351
    %v1431 = vunpack.c.h.b16 %v1351
    %v1432 = vunpack.c.l.b16 %v1352
    %v1433 = vunpack.c.h.b16 %v1352
    %v1434 = vunpack.c.l.b16 %v1353
    %v1435 = vunpack.c.h.b16 %v1353
    %v1436 = vpack.c.b16 %v1406, %v1404
    %v1437 = vpack.c.b16 %v1407, %v1405
    %v1438 = vpack.c.b16 %v1410, %v1408
    %v1439 = vpack.c.b16 %v1411, %v1409
    %v1440 = vpack.c.b16 %v1414, %v1412
    %v1441 = vpack.c.b16 %v1415, %v1413
    %v1442 = vpack.c.b16 %v1418, %v1416
    %v1443 = vpack.c.b16 %v1419, %v1417
    %v1444 = vpack.c.b16 %v1422, %v1420
    %v1445 = vpack.c.b16 %v1423, %v1421
    %v1446 = vpack.c.b16 %v1426, %v1424
    %v1447 = vpack.c.b16 %v1427, %v1425
    %v1448 = vpack.c.b16 %v1430, %v1428
    %v1449 = vpack.c.b16 %v1431, %v1429
    %v1450 = vpack.c.b16 %v1434, %v1432
    %v1451 = vpack.c.b16 %v1435, %v1433
    %1468 = vmatpush.bf16.msra.mxu0 %v1450
    %1469 = vmatpush.bf16.msra.mxu0 %v1448
    %1470 = vmatpush.bf16.msra.mxu0 %v1446
    %1471 = vmatpush.bf16.msra.mxu0 %v1444
    %1472 = vmatpush.bf16.msra.mxu0 %v1442
    %1473 = vmatpush.bf16.msra.mxu0 %v1440
    %1474 = vmatpush.bf16.msra.mxu0 %v1438
    %1475 = vmatpush.bf16.msra.mxu0 %v1436
    %1476 = vmatmul.bf16.gmra.mxu0 %v1386
    %v1477 = vpop.f32.mrf.mxu0
    %v1478 = vadd.f32 0.0, %v1477
    %v1479 = vpop.f32.mrf.mxu0
    %v1480 = vadd.f32 0.0, %v1479
    %1481 = vdwg.mxu0
    %1482 = vmatpush.bf16.msra.mxu0 %v1451
    %1483 = vmatpush.bf16.msra.mxu0 %v1449
    %1484 = vmatpush.bf16.msra.mxu0 %v1447
    %1485 = vmatpush.bf16.msra.mxu0 %v1445
    %1486 = vmatpush.bf16.msra.mxu0 %v1443
    %1487 = vmatpush.bf16.msra.mxu0 %v1441
    %1488 = vmatpush.bf16.msra.mxu0 %v1439
    %1489 = vmatpush.bf16.msra.mxu0 %v1437
    %1490 = vmatmul.bf16.gmra.mxu0 %v1386
    %v1491 = vpop.f32.mrf.mxu0
    %v1492 = vadd.f32 0.0, %v1491
    %v1493 = vpop.f32.mrf.mxu0
    %v1494 = vadd.f32 0.0, %v1493
    %1495 = vdwg.mxu0
    %v1496 = vadd.f32 %v1331, %v1478
    %v1497 = vadd.f32 %v1332, %v1492
    %v1498 = vadd.f32 %v1333, %v1480
    %v1499 = vadd.f32 %v1334, %v1494
    %v1500 = vpack.c.bf16 %v787, %v787
    %v1501 = vpack.c.bf16 %v799, %v799
    %s1502 = scalar_lea.vmem %s3, 512
    %v1503 = vld [vmem:[%s1502] sm:$0xff]
    %v1504 = vld [vmem:[%s1502 + $0x8] sm:$0xff]
    %v1505 = vld [vmem:[%s1502 + $0x10] sm:$0xff]
    %v1506 = vld [vmem:[%s1502 + $0x18] sm:$0xff]
    %v1507 = vld [vmem:[%s1502 + $0x20] sm:$0xff]
    %v1508 = vld [vmem:[%s1502 + $0x28] sm:$0xff]
    %v1509 = vld [vmem:[%s1502 + $0x30] sm:$0xff]
    %v1510 = vld [vmem:[%s1502 + $0x38] sm:$0xff]
    %v1511 = vld [vmem:[%s1502 + $0x40] sm:$0xff]
    %v1512 = vld [vmem:[%s1502 + $0x48] sm:$0xff]
    %v1513 = vld [vmem:[%s1502 + $0x50] sm:$0xff]
    %v1514 = vld [vmem:[%s1502 + $0x58] sm:$0xff]
    %v1515 = vld [vmem:[%s1502 + $0x60] sm:$0xff]
    %v1516 = vld [vmem:[%s1502 + $0x68] sm:$0xff]
    %v1517 = vld [vmem:[%s1502 + $0x70] sm:$0xff]
    %v1518 = vld [vmem:[%s1502 + $0x78] sm:$0xff]
    %v1521 = vunpack.c.l.b16 %v1500
    %v1522 = vunpack.c.l.b16 %v1501
    %v1523 = vrot.slane %v871, 7
    %v1524 = vsel %vm884, %v1523, %v870
    %v1525 = vrot.slane %v872, 6
    %v1526 = vsel %vm887, %v1525, %v1524
    %v1527 = vrot.slane %v873, 5
    %v1528 = vsel %vm890, %v1527, %v1526
    %v1529 = vrot.slane %v874, 4
    %v1530 = vsel %vm893, %v1529, %v1528
    %v1531 = vrot.slane %v1191, 3
    %v1532 = vsel %vm896, %v1531, %v1530
    %v1533 = vrot.slane %v1356, 2
    %v1534 = vsel %vm899, %v1533, %v1532
    %v1535 = vrot.slane %v1521, 1
    %v1536 = vsel %vm902, %v1535, %v1534
    %v1537 = vrot.slane %v879, 7
    %v1538 = vsel %vm884, %v1537, %v878
    %v1539 = vrot.slane %v880, 6
    %v1540 = vsel %vm887, %v1539, %v1538
    %v1541 = vrot.slane %v881, 5
    %v1542 = vsel %vm890, %v1541, %v1540
    %v1543 = vrot.slane %v882, 4
    %v1544 = vsel %vm893, %v1543, %v1542
    %v1545 = vrot.slane %v1192, 3
    %v1546 = vsel %vm896, %v1545, %v1544
    %v1547 = vrot.slane %v1357, 2
    %v1548 = vsel %vm899, %v1547, %v1546
    %v1549 = vrot.slane %v1522, 1
    %v1550 = vsel %vm902, %v1549, %v1548
    %v1551 = vpack.c.b16 %v1550, %v1536
    %v1569 = vunpack.c.l.b16 %v1503
    %v1570 = vunpack.c.h.b16 %v1503
    %v1571 = vunpack.c.l.b16 %v1504
    %v1572 = vunpack.c.h.b16 %v1504
    %v1573 = vunpack.c.l.b16 %v1505
    %v1574 = vunpack.c.h.b16 %v1505
    %v1575 = vunpack.c.l.b16 %v1506
    %v1576 = vunpack.c.h.b16 %v1506
    %v1577 = vunpack.c.l.b16 %v1507
    %v1578 = vunpack.c.h.b16 %v1507
    %v1579 = vunpack.c.l.b16 %v1508
    %v1580 = vunpack.c.h.b16 %v1508
    %v1581 = vunpack.c.l.b16 %v1509
    %v1582 = vunpack.c.h.b16 %v1509
    %v1583 = vunpack.c.l.b16 %v1510
    %v1584 = vunpack.c.h.b16 %v1510
    %v1585 = vunpack.c.l.b16 %v1511
    %v1586 = vunpack.c.h.b16 %v1511
    %v1587 = vunpack.c.l.b16 %v1512
    %v1588 = vunpack.c.h.b16 %v1512
    %v1589 = vunpack.c.l.b16 %v1513
    %v1590 = vunpack.c.h.b16 %v1513
    %v1591 = vunpack.c.l.b16 %v1514
    %v1592 = vunpack.c.h.b16 %v1514
    %v1593 = vunpack.c.l.b16 %v1515
    %v1594 = vunpack.c.h.b16 %v1515
    %v1595 = vunpack.c.l.b16 %v1516
    %v1596 = vunpack.c.h.b16 %v1516
    %v1597 = vunpack.c.l.b16 %v1517
    %v1598 = vunpack.c.h.b16 %v1517
    %v1599 = vunpack.c.l.b16 %v1518
    %v1600 = vunpack.c.h.b16 %v1518
    %v1601 = vpack.c.b16 %v1571, %v1569
    %v1602 = vpack.c.b16 %v1572, %v1570
    %v1603 = vpack.c.b16 %v1575, %v1573
    %v1604 = vpack.c.b16 %v1576, %v1574
    %v1605 = vpack.c.b16 %v1579, %v1577
    %v1606 = vpack.c.b16 %v1580, %v1578
    %v1607 = vpack.c.b16 %v1583, %v1581
    %v1608 = vpack.c.b16 %v1584, %v1582
    %v1609 = vpack.c.b16 %v1587, %v1585
    %v1610 = vpack.c.b16 %v1588, %v1586
    %v1611 = vpack.c.b16 %v1591, %v1589
    %v1612 = vpack.c.b16 %v1592, %v1590
    %v1613 = vpack.c.b16 %v1595, %v1593
    %v1614 = vpack.c.b16 %v1596, %v1594
    %v1615 = vpack.c.b16 %v1599, %v1597
    %v1616 = vpack.c.b16 %v1600, %v1598
    %1633 = vmatpush.bf16.msra.mxu0 %v1615
    %1634 = vmatpush.bf16.msra.mxu0 %v1613
    %1635 = vmatpush.bf16.msra.mxu0 %v1611
    %1636 = vmatpush.bf16.msra.mxu0 %v1609
    %1637 = vmatpush.bf16.msra.mxu0 %v1607
    %1638 = vmatpush.bf16.msra.mxu0 %v1605
    %1639 = vmatpush.bf16.msra.mxu0 %v1603
    %1640 = vmatpush.bf16.msra.mxu0 %v1601
    %1641 = vmatmul.bf16.gmra.mxu0 %v1551
    %v1642 = vpop.f32.mrf.mxu0
    %v1643 = vadd.f32 0.0, %v1642
    %v1644 = vpop.f32.mrf.mxu0
    %v1645 = vadd.f32 0.0, %v1644
    %1646 = vdwg.mxu0
    %1647 = vmatpush.bf16.msra.mxu0 %v1616
    %1648 = vmatpush.bf16.msra.mxu0 %v1614
    %1649 = vmatpush.bf16.msra.mxu0 %v1612
    %1650 = vmatpush.bf16.msra.mxu0 %v1610
    %1651 = vmatpush.bf16.msra.mxu0 %v1608
    %1652 = vmatpush.bf16.msra.mxu0 %v1606
    %1653 = vmatpush.bf16.msra.mxu0 %v1604
    %1654 = vmatpush.bf16.msra.mxu0 %v1602
    %1655 = vmatmul.bf16.gmra.mxu0 %v1551
    %v1656 = vpop.f32.mrf.mxu0
    %v1657 = vadd.f32 0.0, %v1656
    %v1658 = vpop.f32.mrf.mxu0
    %v1659 = vadd.f32 0.0, %v1658
    %1660 = vdwg.mxu0
    %v1661 = vadd.f32 %v1496, %v1643
    %v1662 = vadd.f32 %v1497, %v1657
    %v1663 = vadd.f32 %v1498, %v1645
    %v1664 = vadd.f32 %v1499, %v1659
    %v1665 = vld [vmem:[%s4] sm:$0x3]
    %v1667 = vperm.slane %v1665, 0
    %v1668 = vperm.slane %v1665, 1
    %v1671 = vadd.f32 %v1661, %v1667
    %v1672 = vadd.f32 %v1662, %v1668
    %v1673 = vadd.f32 %v1663, %v1667
    %v1674 = vadd.f32 %v1664, %v1668
    %v1675 = vmax.f32 %v1671, 0.0
    %v1676 = vmax.f32 %v1672, 0.0
    %v1677 = vmax.f32 %v1673, 0.0
    %v1678 = vmax.f32 %v1674, 0.0
    %v1679 = vmax.f32 %v1675, %v1676
    %v1680 = vmax.f32 %v1677, %v1678
    %v1683 = vrot.slane %v1679, 2
    %v1684 = vrot.slane %v1679, 4
    %v1685 = vrot.slane %v1679, 6
    %v1686 = vrot.slane %v1680, 2
    %v1687 = vrot.slane %v1680, 4
    %v1688 = vrot.slane %v1680, 6
    %v1695 = vrot.slane %v1679, 7
    %v1696 = vrot.slane %v1695, 2
    %v1697 = vrot.slane %v1683, 7
    %v1698 = vrot.slane %v1697, 2
    %v1699 = vrot.slane %v1684, 7
    %v1700 = vrot.slane %v1699, 2
    %v1701 = vrot.slane %v1685, 7
    %v1702 = vrot.slane %v1701, 2
    %v1703 = vrot.slane %v1680, 7
    %v1704 = vrot.slane %v1703, 2
    %v1705 = vrot.slane %v1686, 7
    %v1706 = vrot.slane %v1705, 2
    %v1707 = vrot.slane %v1687, 7
    %v1708 = vrot.slane %v1707, 2
    %v1709 = vrot.slane %v1688, 7
    %v1710 = vrot.slane %v1709, 2
    %v1719 = vmax.f32 %v1679, %v1696
    %v1720 = vmax.f32 %v1683, %v1698
    %v1721 = vmax.f32 %v1684, %v1700
    %v1722 = vmax.f32 %v1685, %v1702
    %v1723 = vmax.f32 %v1680, %v1704
    %v1724 = vmax.f32 %v1686, %v1706
    %v1725 = vmax.f32 %v1687, %v1708
    %v1726 = vmax.f32 %v1688, %v1710
    %v1735 = vsel %vm893, %v1719, %v1719
    %v1736 = vsel %vm899, %v1719, %v1735
    %v1737 = vrot.slane %v1720, 7
    %v1738 = vsel %vm884, %v1737, %v1736
    %v1739 = vsel %vm890, %v1737, %v1738
    %v1740 = vsel %vm896, %v1737, %v1739
    %v1741 = vsel %vm902, %v1737, %v1740
    %v1742 = vsel %vm893, %v1721, %v1721
    %v1743 = vsel %vm899, %v1721, %v1742
    %v1744 = vrot.slane %v1722, 7
    %v1745 = vsel %vm884, %v1744, %v1743
    %v1746 = vsel %vm890, %v1744, %v1745
    %v1747 = vsel %vm896, %v1744, %v1746
    %v1748 = vsel %vm902, %v1744, %v1747
    %v1749 = vsel %vm893, %v1723, %v1723
    %v1750 = vsel %vm899, %v1723, %v1749
    %v1751 = vrot.slane %v1724, 7
    %v1752 = vsel %vm884, %v1751, %v1750
    %v1753 = vsel %vm890, %v1751, %v1752
    %v1754 = vsel %vm896, %v1751, %v1753
    %v1755 = vsel %vm902, %v1751, %v1754
    %v1756 = vsel %vm893, %v1725, %v1725
    %v1757 = vsel %vm899, %v1725, %v1756
    %v1758 = vrot.slane %v1726, 7
    %v1759 = vsel %vm884, %v1758, %v1757
    %v1760 = vsel %vm890, %v1758, %v1759
    %v1761 = vsel %vm896, %v1758, %v1760
    %v1762 = vsel %vm902, %v1758, %v1761
    %v1767 = vrot.slane %v1755, 4
    %vm1768 = vcmask 1047556
    %v1769 = vsel %vm1768, %v1767, %v1741
    %v1771 = vunpack.c.l.s4 1934713408
    %v1772 = vunpack.c.0.s8 %v1771
    %v1773 = vperm.slane %v1769, %v1772
    %v1774 = vrot.slane %v1773, 4
    %v1775 = vsel %vm1768, 0.0, %v1774
    %v1776 = vrot.slane %v1762, 4
    %v1777 = vsel %vm1768, %v1776, %v1748
    %v1779 = vunpack.c.l.s4 1934713408
    %v1780 = vunpack.c.0.s8 %v1779
    %v1781 = vperm.slane %v1777, %v1780
    %v1782 = vrot.slane %v1781, 4
    %v1783 = vsel %vm1768, 0.0, %v1782
    %v1784 = vpack.c.bf16 %v1773, %v1773
    %v1785 = vpack.c.bf16 %v1775, %v1775
    %v1786 = vpack.c.bf16 %v1781, %v1781
    %v1787 = vpack.c.bf16 %v1783, %v1783
    %v1788 = vld [vmem:[%s5] sm:$0xf]
    %v1789 = vld [vmem:[%s5 + $0x4] sm:$0xf]
    %v1790 = vld [vmem:[%s5 + $0x8] sm:$0xf]
    %v1791 = vld [vmem:[%s5 + $0xc] sm:$0xf]
    %v1792 = vld [vmem:[%s5 + $0x10] sm:$0xf]
    %v1793 = vld [vmem:[%s5 + $0x14] sm:$0xf]
    %v1794 = vld [vmem:[%s5 + $0x18] sm:$0xf]
    %v1795 = vld [vmem:[%s5 + $0x1c] sm:$0xf]
    %v1796 = vld [vmem:[%s5 + $0x20] sm:$0xf]
    %v1797 = vld [vmem:[%s5 + $0x24] sm:$0xf]
    %v1798 = vld [vmem:[%s5 + $0x28] sm:$0xf]
    %v1799 = vld [vmem:[%s5 + $0x2c] sm:$0xf]
    %v1800 = vld [vmem:[%s5 + $0x30] sm:$0xf]
    %v1801 = vld [vmem:[%s5 + $0x34] sm:$0xf]
    %v1802 = vld [vmem:[%s5 + $0x38] sm:$0xf]
    %v1803 = vld [vmem:[%s5 + $0x3c] sm:$0xf]
    %v1804 = vld [vmem:[%s5 + $0x40] sm:$0xf]
    %v1805 = vld [vmem:[%s5 + $0x44] sm:$0xf]
    %v1806 = vld [vmem:[%s5 + $0x48] sm:$0xf]
    %v1807 = vld [vmem:[%s5 + $0x4c] sm:$0xf]
    %v1808 = vld [vmem:[%s5 + $0x50] sm:$0xf]
    %v1809 = vld [vmem:[%s5 + $0x54] sm:$0xf]
    %v1810 = vld [vmem:[%s5 + $0x58] sm:$0xf]
    %v1811 = vld [vmem:[%s5 + $0x5c] sm:$0xf]
    %v1812 = vld [vmem:[%s5 + $0x60] sm:$0xf]
    %v1813 = vld [vmem:[%s5 + $0x64] sm:$0xf]
    %v1814 = vld [vmem:[%s5 + $0x68] sm:$0xf]
    %v1815 = vld [vmem:[%s5 + $0x6c] sm:$0xf]
    %v1816 = vld [vmem:[%s5 + $0x70] sm:$0xf]
    %v1817 = vld [vmem:[%s5 + $0x74] sm:$0xf]
    %v1818 = vld [vmem:[%s5 + $0x78] sm:$0xf]
    %v1819 = vld [vmem:[%s5 + $0x7c] sm:$0xf]
    %v1820 = vld [vmem:[%s5 + $0x80] sm:$0xf]
    %v1821 = vld [vmem:[%s5 + $0x84] sm:$0xf]
    %v1822 = vld [vmem:[%s5 + $0x88] sm:$0xf]
    %v1823 = vld [vmem:[%s5 + $0x8c] sm:$0xf]
    %v1824 = vld [vmem:[%s5 + $0x90] sm:$0xf]
    %v1825 = vld [vmem:[%s5 + $0x94] sm:$0xf]
    %v1826 = vld [vmem:[%s5 + $0x98] sm:$0xf]
    %v1827 = vld [vmem:[%s5 + $0x9c] sm:$0xf]
    %v1828 = vld [vmem:[%s5 + $0xa0] sm:$0xf]
    %v1829 = vld [vmem:[%s5 + $0xa4] sm:$0xf]
    %v1830 = vld [vmem:[%s5 + $0xa8] sm:$0xf]
    %v1831 = vld [vmem:[%s5 + $0xac] sm:$0xf]
    %v1832 = vld [vmem:[%s5 + $0xb0] sm:$0xf]
    %v1833 = vld [vmem:[%s5 + $0xb4] sm:$0xf]
    %v1834 = vld [vmem:[%s5 + $0xb8] sm:$0xf]
    %v1835 = vld [vmem:[%s5 + $0xbc] sm:$0xf]
    %v1836 = vld [vmem:[%s5 + $0xc0] sm:$0xf]
    %v1837 = vld [vmem:[%s5 + $0xc4] sm:$0xf]
    %v1838 = vld [vmem:[%s5 + $0xc8] sm:$0xf]
    %v1839 = vld [vmem:[%s5 + $0xcc] sm:$0xf]
    %v1840 = vld [vmem:[%s5 + $0xd0] sm:$0xf]
    %v1841 = vld [vmem:[%s5 + $0xd4] sm:$0xf]
    %v1842 = vld [vmem:[%s5 + $0xd8] sm:$0xf]
    %v1843 = vld [vmem:[%s5 + $0xdc] sm:$0xf]
    %v1844 = vld [vmem:[%s5 + $0xe0] sm:$0xf]
    %v1845 = vld [vmem:[%s5 + $0xe4] sm:$0xf]
    %v1846 = vld [vmem:[%s5 + $0xe8] sm:$0xf]
    %v1847 = vld [vmem:[%s5 + $0xec] sm:$0xf]
    %v1848 = vld [vmem:[%s5 + $0xf0] sm:$0xf]
    %v1849 = vld [vmem:[%s5 + $0xf4] sm:$0xf]
    %v1850 = vld [vmem:[%s5 + $0xf8] sm:$0xf]
    %v1851 = vld [vmem:[%s5 + $0xfc] sm:$0xf]
    %v1852 = vld [vmem:[%s6] sm:$0x1]
    %v1854 = vperm.slane %v1852, 0
    %v1920 = vunpack.c.l.b16 %v1788
    %v1921 = vunpack.c.l.b16 %v1789
    %v1922 = vunpack.c.l.b16 %v1790
    %v1923 = vunpack.c.l.b16 %v1791
    %v1924 = vunpack.c.l.b16 %v1792
    %v1925 = vunpack.c.l.b16 %v1793
    %v1926 = vunpack.c.l.b16 %v1794
    %v1927 = vunpack.c.l.b16 %v1795
    %v1928 = vunpack.c.l.b16 %v1796
    %v1929 = vunpack.c.l.b16 %v1797
    %v1930 = vunpack.c.l.b16 %v1798
    %v1931 = vunpack.c.l.b16 %v1799
    %v1932 = vunpack.c.l.b16 %v1800
    %v1933 = vunpack.c.l.b16 %v1801
    %v1934 = vunpack.c.l.b16 %v1802
    %v1935 = vunpack.c.l.b16 %v1803
    %v1936 = vunpack.c.l.b16 %v1804
    %v1937 = vunpack.c.l.b16 %v1805
    %v1938 = vunpack.c.l.b16 %v1806
    %v1939 = vunpack.c.l.b16 %v1807
    %v1940 = vunpack.c.l.b16 %v1808
    %v1941 = vunpack.c.l.b16 %v1809
    %v1942 = vunpack.c.l.b16 %v1810
    %v1943 = vunpack.c.l.b16 %v1811
    %v1944 = vunpack.c.l.b16 %v1812
    %v1945 = vunpack.c.l.b16 %v1813
    %v1946 = vunpack.c.l.b16 %v1814
    %v1947 = vunpack.c.l.b16 %v1815
    %v1948 = vunpack.c.l.b16 %v1816
    %v1949 = vunpack.c.l.b16 %v1817
    %v1950 = vunpack.c.l.b16 %v1818
    %v1951 = vunpack.c.l.b16 %v1819
    %v1952 = vunpack.c.l.b16 %v1820
    %v1953 = vunpack.c.l.b16 %v1821
    %v1954 = vunpack.c.l.b16 %v1822
    %v1955 = vunpack.c.l.b16 %v1823
    %v1956 = vunpack.c.l.b16 %v1824
    %v1957 = vunpack.c.l.b16 %v1825
    %v1958 = vunpack.c.l.b16 %v1826
    %v1959 = vunpack.c.l.b16 %v1827
    %v1960 = vunpack.c.l.b16 %v1828
    %v1961 = vunpack.c.l.b16 %v1829
    %v1962 = vunpack.c.l.b16 %v1830
    %v1963 = vunpack.c.l.b16 %v1831
    %v1964 = vunpack.c.l.b16 %v1832
    %v1965 = vunpack.c.l.b16 %v1833
    %v1966 = vunpack.c.l.b16 %v1834
    %v1967 = vunpack.c.l.b16 %v1835
    %v1968 = vunpack.c.l.b16 %v1836
    %v1969 = vunpack.c.l.b16 %v1837
    %v1970 = vunpack.c.l.b16 %v1838
    %v1971 = vunpack.c.l.b16 %v1839
    %v1972 = vunpack.c.l.b16 %v1840
    %v1973 = vunpack.c.l.b16 %v1841
    %v1974 = vunpack.c.l.b16 %v1842
    %v1975 = vunpack.c.l.b16 %v1843
    %v1976 = vunpack.c.l.b16 %v1844
    %v1977 = vunpack.c.l.b16 %v1845
    %v1978 = vunpack.c.l.b16 %v1846
    %v1979 = vunpack.c.l.b16 %v1847
    %v1980 = vunpack.c.l.b16 %v1848
    %v1981 = vunpack.c.l.b16 %v1849
    %v1982 = vunpack.c.l.b16 %v1850
    %v1983 = vunpack.c.l.b16 %v1851
    %v1984 = vpack.c.b16 %v1921, %v1920
    %v1985 = vpack.c.b16 %v1923, %v1922
    %v1986 = vpack.c.b16 %v1925, %v1924
    %v1987 = vpack.c.b16 %v1927, %v1926
    %v1988 = vpack.c.b16 %v1929, %v1928
    %v1989 = vpack.c.b16 %v1931, %v1930
    %v1990 = vpack.c.b16 %v1933, %v1932
    %v1991 = vpack.c.b16 %v1935, %v1934
    %v1992 = vpack.c.b16 %v1937, %v1936
    %v1993 = vpack.c.b16 %v1939, %v1938
    %v1994 = vpack.c.b16 %v1941, %v1940
    %v1995 = vpack.c.b16 %v1943, %v1942
    %v1996 = vpack.c.b16 %v1945, %v1944
    %v1997 = vpack.c.b16 %v1947, %v1946
    %v1998 = vpack.c.b16 %v1949, %v1948
    %v1999 = vpack.c.b16 %v1951, %v1950
    %v2000 = vpack.c.b16 %v1953, %v1952
    %v2001 = vpack.c.b16 %v1955, %v1954
    %v2002 = vpack.c.b16 %v1957, %v1956
    %v2003 = vpack.c.b16 %v1959, %v1958
    %v2004 = vpack.c.b16 %v1961, %v1960
    %v2005 = vpack.c.b16 %v1963, %v1962
    %v2006 = vpack.c.b16 %v1965, %v1964
    %v2007 = vpack.c.b16 %v1967, %v1966
    %v2008 = vpack.c.b16 %v1969, %v1968
    %v2009 = vpack.c.b16 %v1971, %v1970
    %v2010 = vpack.c.b16 %v1973, %v1972
    %v2011 = vpack.c.b16 %v1975, %v1974
    %v2012 = vpack.c.b16 %v1977, %v1976
    %v2013 = vpack.c.b16 %v1979, %v1978
    %v2014 = vpack.c.b16 %v1981, %v1980
    %v2015 = vpack.c.b16 %v1983, %v1982
    %2048 = vmatpush.bf16.msra.mxu0 %v1991
    %2049 = vmatpush.bf16.msra.mxu0 %v1990
    %2050 = vmatpush.bf16.msra.mxu0 %v1989
    %2051 = vmatpush.bf16.msra.mxu0 %v1988
    %2052 = vmatpush.bf16.msra.mxu0 %v1987
    %2053 = vmatpush.bf16.msra.mxu0 %v1986
    %2054 = vmatpush.bf16.msra.mxu0 %v1985
    %2055 = vmatpush.bf16.msra.mxu0 %v1984
    %2056 = vmatmul.bf16.gmra.mxu0 %v1784
    %v2057 = vpop.f32.mrf.mxu0
    %v2058 = vadd.f32 %v1854, %v2057
    %v2059 = vpop.f32.mrf.mxu0
    %2060 = vdwg.mxu0
    %2061 = vmatpush.bf16.msra.mxu0 %v1999
    %2062 = vmatpush.bf16.msra.mxu0 %v1998
    %2063 = vmatpush.bf16.msra.mxu0 %v1997
    %2064 = vmatpush.bf16.msra.mxu0 %v1996
    %2065 = vmatpush.bf16.msra.mxu0 %v1995
    %2066 = vmatpush.bf16.msra.mxu0 %v1994
    %2067 = vmatpush.bf16.msra.mxu0 %v1993
    %2068 = vmatpush.bf16.msra.mxu0 %v1992
    %2069 = vmatmul.bf16.gmra.mxu0 %v1785
    %v2070 = vpop.f32.mrf.mxu0
    %v2071 = vadd.f32 %v2058, %v2070
    %v2072 = vpop.f32.mrf.mxu0
    %2073 = vdwg.mxu0
    %2074 = vmatpush.bf16.msra.mxu0 %v2007
    %2075 = vmatpush.bf16.msra.mxu0 %v2006
    %2076 = vmatpush.bf16.msra.mxu0 %v2005
    %2077 = vmatpush.bf16.msra.mxu0 %v2004
    %2078 = vmatpush.bf16.msra.mxu0 %v2003
    %2079 = vmatpush.bf16.msra.mxu0 %v2002
    %2080 = vmatpush.bf16.msra.mxu0 %v2001
    %2081 = vmatpush.bf16.msra.mxu0 %v2000
    %2082 = vmatmul.bf16.gmra.mxu0 %v1786
    %v2083 = vpop.f32.mrf.mxu0
    %v2084 = vadd.f32 %v2071, %v2083
    %v2085 = vpop.f32.mrf.mxu0
    %2086 = vdwg.mxu0
    %2087 = vmatpush.bf16.msra.mxu0 %v2015
    %2088 = vmatpush.bf16.msra.mxu0 %v2014
    %2089 = vmatpush.bf16.msra.mxu0 %v2013
    %2090 = vmatpush.bf16.msra.mxu0 %v2012
    %2091 = vmatpush.bf16.msra.mxu0 %v2011
    %2092 = vmatpush.bf16.msra.mxu0 %v2010
    %2093 = vmatpush.bf16.msra.mxu0 %v2009
    %2094 = vmatpush.bf16.msra.mxu0 %v2008
    %2095 = vmatmul.bf16.gmra.mxu0 %v1787
    %v2096 = vpop.f32.mrf.mxu0
    %v2097 = vadd.f32 %v2084, %v2096
    %v2098 = vpop.f32.mrf.mxu0
    %2099 = vdwg.mxu0
    %v2100 = vmax.f32 %v2097, 0.0
    %v2101 = vld [vmem:[%s9] sm:$0x3]
    %v2102 = vmul.f32 %v2100, %v2101
    %v2103 = vpack.c.bf16 %v2102, %v2102
    %v2104 = vld [vmem:[%s7] sm:$0xf]
    %v2105 = vld [vmem:[%s7 + $0x4] sm:$0xf]
    %v2106 = vld [vmem:[%s7 + $0x8] sm:$0xf]
    %v2107 = vld [vmem:[%s7 + $0xc] sm:$0xf]
    %v2108 = vld [vmem:[%s7 + $0x10] sm:$0xf]
    %v2109 = vld [vmem:[%s7 + $0x14] sm:$0xf]
    %v2110 = vld [vmem:[%s7 + $0x18] sm:$0x1]
    %v2111 = vld [vmem:[%s8] sm:$0x1]
    %v2113 = vperm.slane %v2111, 0
    %v2122 = vunpack.c.l.b16 %v2104
    %v2123 = vunpack.c.l.b16 %v2105
    %v2124 = vunpack.c.l.b16 %v2106
    %v2125 = vunpack.c.l.b16 %v2107
    %v2126 = vunpack.c.l.b16 %v2108
    %v2127 = vunpack.c.l.b16 %v2109
    %v2128 = vunpack.c.l.b16 %v2110
    %v2129 = vpack.c.b16 %v2123, %v2122
    %v2130 = vpack.c.b16 %v2125, %v2124
    %v2131 = vpack.c.b16 %v2127, %v2126
    %v2132 = vpack.c.b16 %v2128, %v2128
    %vm2136 = vcmask 408576
    %v2138 = vsel %vm2136, %v2103, 0
    %vm2140 = vcmask 1040384
    %v2142 = vsel %vm2140, %v2132, 0
    %2144 = vmatpush.bf16.msra.mxu0 0
    %2145 = vmatpush.bf16.msra.mxu0 0
    %2146 = vmatpush.bf16.msra.mxu0 0
    %2147 = vmatpush.bf16.msra.mxu0 0
    %2148 = vmatpush.bf16.msra.mxu0 %v2142
    %2149 = vmatpush.bf16.msra.mxu0 %v2131
    %2150 = vmatpush.bf16.msra.mxu0 %v2130
    %2151 = vmatpush.bf16.msra.mxu0 %v2129
    %2152 = vmatmul.bf16.gmra.mxu0 %v2138
    %v2153 = vpop.f32.mrf.mxu0
    %v2154 = vadd.f32 %v2113, %v2153
    %v2155 = vpop.f32.mrf.mxu0
    %2156 = vdwg.mxu0
    %vm2157 = vcmask 74752
    %2158 = vst.msk [vmem:[#allocation2] sm:$0x3] %vm2157, %v2154
    // Predicated region
    $region42: #{cnn_forward.1} parent=1 // pred_check
      _
    $region43: #{cnn_forward.1} parent=1 // pred_check_branch
      %2160 = sbr.rel (0) target = $region45
    $region44: #{cnn_forward.1} parent=1 // pred_region
      %2162 = vsyncadd [#allocation3], 0
      %s2164 = sshll.u32 [#allocation2], 4
      %s2165 = int_to_ptr.vmem [resolvable:$true] %s2164
      %s2166 = sshll.u32 %s10, 4
      %s2167 = int_to_ptr.hbm [resolvable:$true] %s2166
      %2169 = dma.vmem_to_hbm [thread:$0]  %s2165, 32, %s2167, [#allocation3]
    $region45: #{cnn_forward.1} parent=1 // pred_fallthru
      _
    // Predicated region
    $region46: #{cnn_forward.1} parent=1 // pred_check
      _
    $region47: #{cnn_forward.1} parent=1 // pred_check_branch
      %2171 = sbr.rel (0) target = $region49
    $region48: #{cnn_forward.1} parent=1 // pred_region
      %2173 = dma.done [#allocation3], 32
    $region49: #{cnn_forward.1} parent=1 // pred_fallthru
      _
    %2174 = vsyncpa [#allocation3], 1

</llo_original>
